<compile_context>
chip_gen: v7x
topology: tpu7x:2x2x1
jax: 0.10.0
libtpu: 0.0.40
codegen_flags: <defaults>
</compile_context>

<pallas_src>
import math

import jax
import jax.numpy as jnp
from jax.experimental import pallas as pl
from jax.experimental.pallas import tpu as pltpu

# --- config (small, consistent with the module) ---
BATCH = 2
SEQ = 8
HIDDEN = 32
NUM_HEADS = 4
HEAD_SIZE = HIDDEN // NUM_HEADS


def bert_attention_kernel(x_ref, mask_ref, wqkv_ref, bqkv_ref, out_ref):
    """x_ref:    (B*L, H)              activations, batch folded into rows
       mask_ref: (B, 1, L)             1.0 = attend, 0.0 = masked
       wqkv_ref: (H, NUM_HEADS*3*d)    per-head [q|k|v] column blocks; q pre-scaled
       bqkv_ref: (1, NUM_HEADS*3*d)
       out_ref:  (B*L, H)              heads concatenated head-major along lanes."""
    n_rows, _ = x_ref.shape
    b = mask_ref.shape[0]
    seq = n_rows // b
    nh, d = NUM_HEADS, HEAD_SIZE

    x = x_ref[...]

    # One fused QKV projection on the MXU (1/sqrt(d) folded into the Q columns).
    # TODO(synk): at real BERT shapes, cast x / wqkv (and p below) to bf16 for
    # the MXU on v6e/v7x, keeping f32 accumulation and f32 softmax math.
    qkv = jnp.dot(x, wqkv_ref[...], preferred_element_type=jnp.float32) + bqkv_ref[...]

    # Merge heads into the batch dim.  Head n's [q|k|v] block is 3*d contiguous
    # lanes, so 4 lane slices + one major-axis concat give (nh*B, L, 3d); batch
    # index is n*B + b (head-major).
    qkv_h = jnp.concatenate(
        [qkv[:, n * 3 * d:(n + 1) * 3 * d].reshape(b, seq, 3 * d)
         for n in range(nh)],
        axis=0)                                             # (nh*B, L, 3d)
    q = qkv_h[..., :d]                                      # (nh*B, L, d)
    k = qkv_h[..., d:2 * d]
    v = qkv_h[..., 2 * d:]

    # Additive mask over the key axis, built and replicated across heads ONCE.
    neg = (1.0 - mask_ref[...]) * -10000.0                  # (B, 1, L)
    neg = jnp.broadcast_to(neg[None], (nh, b, 1, seq)).reshape(nh * b, 1, seq)

    # Single batched score matmul + mask add + softmax over all (head, batch).
    s = jnp.einsum('bqd,bkd->bqk', q, k,
                   preferred_element_type=jnp.float32)      # (nh*B, L, L)
    s = s + neg
    s = s - jnp.max(s, axis=-1, keepdims=True)              # softmax(dim=-1)
    e = jnp.exp(s)
    p = e / jnp.sum(e, axis=-1, keepdims=True)              # exact divide (parity)
    # TODO(synk): dropout(p) is identity here (eval mode).

    ctx = jnp.einsum('bqk,bkd->bqd', p, v,
                     preferred_element_type=jnp.float32)    # (nh*B, L, d)

    # Reassemble (B*L, H) with head-major columns; ONE coalesced 32-lane store.
    ctx = ctx.reshape(nh, n_rows, d)                        # (nh, B*L, d)
    out_ref[...] = jnp.concatenate([ctx[n] for n in range(nh)], axis=-1)


def bert_attention(x, masked_attention, wqkv, bqkv):
    B, L, H = x.shape
    x2 = x.reshape(B * L, H)                                # layout plumbing (free)
    mask3 = masked_attention.reshape(B, 1, L).astype(jnp.float32)

    # Whole (tiny) problem in one invocation, no grid: per-step pipeline
    # bookkeeping and double-buffering buy nothing for a single step.  At real
    # BERT sizes one would grid over (batch/heads, q-tiles, k-tiles) with
    # ("parallel", "parallel", "arbitrary") semantics (v7x: 2 TCs) and budget
    # the packed weight against v7x's 64 MiB VMEM (bf16 + single-buffered).
    vmem = lambda: pl.BlockSpec(memory_space=pltpu.MemorySpace.VMEM)
    out2 = pl.pallas_call(
        bert_attention_kernel,
        out_shape=jax.ShapeDtypeStruct((B * L, H), jnp.float32),
        in_specs=[vmem(), vmem(), vmem(), vmem()],
        out_specs=vmem(),
    )(x2, mask3, wqkv, bqkv)
    return out2.reshape(B, L, H)


# --- parameters (PyTorch nn.Linear layout) and one-time packing ---

def init_params(key):
    ks = jax.random.split(key, 6)

    def linear(kw, kb, din, dout):
        w = jax.random.normal(kw, (dout, din), jnp.float32) * 0.02   # (out, in)
        b = jax.random.normal(kb, (dout,), jnp.float32) * 0.02
        return w, b

    wq, bq = linear(ks[0], ks[1], HIDDEN, HIDDEN)
    wk, bk = linear(ks[2], ks[3], HIDDEN, HIDDEN)
    wv, bv = linear(ks[4], ks[5], HIDDEN, HIDDEN)
    return dict(wq=wq, bq=bq, wk=wk, bk=bk, wv=wv, bv=bv)


def pack_qkv_params(params):
    """Pack q/k/v weights into one (H, 3H) slab in y = x @ W + b layout, with
    HEAD-MAJOR column blocks [q_h | k_h | v_h] per head, and fold the
    1/sqrt(head_size) attention scale into the Q columns/bias."""
    scale = 1.0 / math.sqrt(HEAD_SIZE)
    wq_t = params["wq"].T * scale                       # (in, out)
    wk_t = params["wk"].T
    wv_t = params["wv"].T
    bq = params["bq"] * scale
    bk = params["bk"]
    bv = params["bv"]

    w_cols, b_cols = [], []
    for n in range(NUM_HEADS):
        sl = slice(n * HEAD_SIZE, (n + 1) * HEAD_SIZE)
        w_cols += [wq_t[:, sl], wk_t[:, sl], wv_t[:, sl]]
        b_cols += [bq[sl], bk[sl], bv[sl]]
    wqkv = jnp.concatenate(w_cols, axis=1)              # (H, NUM_HEADS*3*d) = (H, 3H)
    bqkv = jnp.concatenate(b_cols)[None, :]             # (1, 3H)
    return wqkv, bqkv


# --- pure-JAX reference mirroring the PyTorch module ---

def bert_attention_ref(x, masked_attention, params):
    B, L, H = x.shape
    d = HEAD_SIZE

    def proj(w, b):
        p = x @ w.T + b
        return p.reshape(B, L, NUM_HEADS, d).transpose(0, 2, 1, 3)   # (B, h, L, d)

    q = proj(params["wq"], params["bq"])
    k = proj(params["wk"], params["bk"])
    v = proj(params["wv"], params["bv"])
    s = jnp.einsum('bhqd,bhkd->bhqk', q, k) / math.sqrt(d)
    s = s + (1.0 - masked_attention)[:, None, None, :] * -10000.0
    p_attn = jax.nn.softmax(s, axis=-1)
    ctx = jnp.einsum('bhqk,bhkd->bhqd', p_attn, v)
    return ctx.transpose(0, 2, 1, 3).reshape(B, L, H)


if __name__ == "__main__":
    key = jax.random.PRNGKey(0)
    kx, kp = jax.random.split(key)

    x = jax.random.normal(kx, (BATCH, SEQ, HIDDEN), jnp.float32)
    # attention mask: 1.0 = attend, 0.0 = masked (last two tokens masked out)
    masked_attention = jnp.ones((BATCH, SEQ), jnp.float32).at[:, -2:].set(0.0)

    params = init_params(kp)
    wqkv, bqkv = pack_qkv_params(params)

    out = bert_attention(x, masked_attention, wqkv, bqkv)
    out = jax.block_until_ready(out)

    ref = bert_attention_ref(x, masked_attention, params)
    assert out.shape == (BATCH, SEQ, HIDDEN)
    assert bool(jnp.all(jnp.isfinite(out)))
    # exact softmax divide -> much tighter tolerance than the previous 2e-2
    assert bool(jnp.allclose(out, ref, rtol=1e-3, atol=1e-4))
    print("KERNEL_OK")
</pallas_src>

<mosaic_0001>
module attributes {stable_mosaic.version = 11 : i64} {
  func.func @bert_attention_kernel(%arg0: memref<16x32xf32, #tpu.memory_space<vmem>>, %arg1: memref<2x1x8xf32, #tpu.memory_space<vmem>>, %arg2: memref<32x96xf32, #tpu.memory_space<vmem>>, %arg3: memref<1x96xf32, #tpu.memory_space<vmem>>, %arg4: memref<16x32xf32, #tpu.memory_space<vmem>>) attributes {dimension_semantics = [], scalar_prefetch = 0 : i64, scratch_operands = 0 : i64, tpu.core_type = #tpu.core_type<tc>} {
    %c0 = arith.constant 0 : index
    %c0_0 = arith.constant 0 : index
    %0 = vector.load %arg0[%c0, %c0_0] : memref<16x32xf32, #tpu.memory_space<vmem>>, vector<16x32xf32>
    %c0_1 = arith.constant 0 : index
    %c0_2 = arith.constant 0 : index
    %1 = vector.load %arg2[%c0_1, %c0_2] : memref<32x96xf32, #tpu.memory_space<vmem>>, vector<32x96xf32>
    %cst = arith.constant dense<0.000000e+00> : vector<16x96xf32>
    %2 = tpu.matmul %0, %1, %cst {dimension_numbers = #tpu.dot_dimension_numbers<[1], [0], [0], [1], [0, 0, 1, 1], [], []>} : vector<16x32xf32>, vector<32x96xf32>, vector<16x96xf32> -> vector<16x96xf32>
    %c0_3 = arith.constant 0 : index
    %c0_4 = arith.constant 0 : index
    %3 = vector.load %arg3[%c0_3, %c0_4] : memref<1x96xf32, #tpu.memory_space<vmem>>, vector<1x96xf32>
    %4 = vector.broadcast %3 : vector<1x96xf32> to vector<16x96xf32>
    %5 = arith.addf %2, %4 : vector<16x96xf32>
    %6 = vector.extract_strided_slice %5 {offsets = [0, 0], sizes = [16, 24], strides = [1, 1]} : vector<16x96xf32> to vector<16x24xf32>
    %7 = vector.shape_cast %6 : vector<16x24xf32> to vector<2x8x24xf32>
    %8 = vector.extract_strided_slice %5 {offsets = [0, 24], sizes = [16, 24], strides = [1, 1]} : vector<16x96xf32> to vector<16x24xf32>
    %9 = vector.shape_cast %8 : vector<16x24xf32> to vector<2x8x24xf32>
    %10 = vector.extract_strided_slice %5 {offsets = [0, 48], sizes = [16, 24], strides = [1, 1]} : vector<16x96xf32> to vector<16x24xf32>
    %11 = vector.shape_cast %10 : vector<16x24xf32> to vector<2x8x24xf32>
    %12 = vector.extract_strided_slice %5 {offsets = [0, 72], sizes = [16, 24], strides = [1, 1]} : vector<16x96xf32> to vector<16x24xf32>
    %13 = vector.shape_cast %12 : vector<16x24xf32> to vector<2x8x24xf32>
    %14 = tpu.concatenate %7, %9, %11, %13 in 0 : vector<2x8x24xf32>, vector<2x8x24xf32>, vector<2x8x24xf32>, vector<2x8x24xf32> -> vector<8x8x24xf32>
    %15 = vector.extract_strided_slice %14 {offsets = [0, 0, 0], sizes = [8, 8, 8], strides = [1, 1, 1]} : vector<8x8x24xf32> to vector<8x8x8xf32>
    %16 = vector.extract_strided_slice %14 {offsets = [0, 0, 8], sizes = [8, 8, 8], strides = [1, 1, 1]} : vector<8x8x24xf32> to vector<8x8x8xf32>
    %17 = vector.extract_strided_slice %14 {offsets = [0, 0, 16], sizes = [8, 8, 8], strides = [1, 1, 1]} : vector<8x8x24xf32> to vector<8x8x8xf32>
    %c0_5 = arith.constant 0 : index
    %c0_6 = arith.constant 0 : index
    %c0_7 = arith.constant 0 : index
    %18 = vector.load %arg1[%c0_5, %c0_6, %c0_7] : memref<2x1x8xf32, #tpu.memory_space<vmem>>, vector<2x1x8xf32>
    %cst_8 = arith.constant 1.000000e+00 : f32
    %19 = vector.broadcast %cst_8 : f32 to vector<2x1x8xf32>
    %20 = arith.subf %19, %18 : vector<2x1x8xf32>
    %cst_9 = arith.constant -1.000000e+04 : f32
    %21 = vector.broadcast %cst_9 : f32 to vector<2x1x8xf32>
    %22 = arith.mulf %20, %21 : vector<2x1x8xf32>
    %23 = vector.shape_cast %22 : vector<2x1x8xf32> to vector<1x2x1x8xf32>
    %24 = vector.shape_cast %23 : vector<1x2x1x8xf32> to vector<1x2x1x8xf32>
    %25 = vector.broadcast %24 : vector<1x2x1x8xf32> to vector<4x2x1x8xf32>
    %26 = vector.shape_cast %25 : vector<4x2x1x8xf32> to vector<8x1x8xf32>
    "tpu.trace_start"() <{level = 10 : i32, message = "bqd,bkd->bqk"}> : () -> ()
    %cst_10 = arith.constant dense<0.000000e+00> : vector<8x8x8xf32>
    %27 = tpu.matmul %15, %16, %cst_10 {dimension_numbers = #tpu.dot_dimension_numbers<[2], [2], [1], [1], [0, 0, 0, 1, 1, 1], [0], [0]>} : vector<8x8x8xf32>, vector<8x8x8xf32>, vector<8x8x8xf32> -> vector<8x8x8xf32>
    "tpu.trace_stop"() : () -> ()
    %28 = vector.broadcast %26 : vector<8x1x8xf32> to vector<8x8x8xf32>
    %29 = arith.addf %27, %28 : vector<8x8x8xf32>
    %cst_11 = arith.constant dense<0xFF800000> : vector<8x8xf32>
    %30 = vector.multi_reduction <maximumf>, %29, %cst_11 [2] : vector<8x8x8xf32> to vector<8x8xf32>
    %31 = vector.shape_cast %30 : vector<8x8xf32> to vector<8x8x1xf32>
    %32 = vector.broadcast %31 : vector<8x8x1xf32> to vector<8x8x8xf32>
    %33 = arith.subf %29, %32 : vector<8x8x8xf32>
    %34 = math.exp %33 : vector<8x8x8xf32>
    %cst_12 = arith.constant dense<0.000000e+00> : vector<8x8xf32>
    %35 = vector.multi_reduction <add>, %34, %cst_12 [2] : vector<8x8x8xf32> to vector<8x8xf32>
    %36 = vector.shape_cast %35 : vector<8x8xf32> to vector<8x8x1xf32>
    %37 = vector.broadcast %36 : vector<8x8x1xf32> to vector<8x8x8xf32>
    %38 = arith.divf %34, %37 : vector<8x8x8xf32>
    "tpu.trace_start"() <{level = 10 : i32, message = "bqk,bkd->bqd"}> : () -> ()
    %cst_13 = arith.constant dense<0.000000e+00> : vector<8x8x8xf32>
    %39 = tpu.matmul %38, %17, %cst_13 {dimension_numbers = #tpu.dot_dimension_numbers<[2], [1], [1], [2], [0, 0, 0, 1, 1, 2], [0], [0]>} : vector<8x8x8xf32>, vector<8x8x8xf32>, vector<8x8x8xf32> -> vector<8x8x8xf32>
    "tpu.trace_stop"() : () -> ()
    %40 = vector.shape_cast %39 : vector<8x8x8xf32> to vector<4x16x8xf32>
    %41 = vector.extract_strided_slice %40 {offsets = [0, 0, 0], sizes = [1, 16, 8], strides = [1, 1, 1]} : vector<4x16x8xf32> to vector<1x16x8xf32>
    %42 = vector.shape_cast %41 : vector<1x16x8xf32> to vector<16x8xf32>
    %43 = vector.extract_strided_slice %40 {offsets = [1, 0, 0], sizes = [1, 16, 8], strides = [1, 1, 1]} : vector<4x16x8xf32> to vector<1x16x8xf32>
    %44 = vector.shape_cast %43 : vector<1x16x8xf32> to vector<16x8xf32>
    %45 = vector.extract_strided_slice %40 {offsets = [2, 0, 0], sizes = [1, 16, 8], strides = [1, 1, 1]} : vector<4x16x8xf32> to vector<1x16x8xf32>
    %46 = vector.shape_cast %45 : vector<1x16x8xf32> to vector<16x8xf32>
    %47 = vector.extract_strided_slice %40 {offsets = [3, 0, 0], sizes = [1, 16, 8], strides = [1, 1, 1]} : vector<4x16x8xf32> to vector<1x16x8xf32>
    %48 = vector.shape_cast %47 : vector<1x16x8xf32> to vector<16x8xf32>
    %49 = tpu.concatenate %42, %44, %46, %48 in 1 : vector<16x8xf32>, vector<16x8xf32>, vector<16x8xf32>, vector<16x8xf32> -> vector<16x32xf32>
    %c0_14 = arith.constant 0 : index
    %c0_15 = arith.constant 0 : index
    %50 = vector.load %arg4[%c0_14, %c0_15] : memref<16x32xf32, #tpu.memory_space<vmem>>, vector<16x32xf32>
    tpu.vector_store %arg4[%c0_14, %c0_15], %49 {strides = array<i32>} : memref<16x32xf32, #tpu.memory_space<vmem>>, vector<16x32xf32>,
    return
  }
}

</mosaic_0001>

<llo_original>
// kernel: tpu_custom_call.1
$region0: #{tpu_custom_call.1}
  #allocation0 [shape = 'u32[]', space=smem, size = 0x4, offset = 0x4, fixed_abs, tag = 'smem constant byte address 0x4 - core index']
  #allocation1 [shape = 'u32[144,128]{1,0:T(1,128)}', space=vmem, size = 0x12000, scoped, tag = 'internal scratch']
  %s0 = inlined_call_operand.hbm [shape: f32[16,32], index: 0, kind: input, shape index: {}]
  %s1 = inlined_call_operand.vmem [shape: f32[2,1,8], index: 1, kind: input, shape index: {}]
  %s2 = inlined_call_operand.hbm [shape: f32[32,96], index: 2, kind: input, shape index: {}]
  %s3 = inlined_call_operand.vmem [shape: f32[1,96], index: 3, kind: input, shape index: {}]
  %s4 = inlined_call_operand.hbm [shape: f32[16,32], index: 4, kind: output, shape index: {}]
  %s5 = sld [smem:[#allocation0]]
  $region34: #{tpu_custom_call.1} parent=0
    _
  %s7 = ssub.s32 1, %s5
  %s8 = scalar_select 0, %s7, %s5
  $region1: #{tpu_custom_call.1} parent=0
    #allocation2 [shape = 'u8[8192]{0}', space=vmem, size = 0x2000, scoped, tag = 'input window, operand 0, single buffered']
    #allocation3 [shape = 's32[1]{0}', space=sflag, size = 0x4, scoped, tag = 'scoped memory for tpu_custom_call.1']
    #allocation4 [shape = 's32[1]{0}', space=sflag, size = 0x4, scoped, tag = 'scoped memory for tpu_custom_call.1']
    #allocation5 [shape = 'u8[16384]{0}', space=vmem, size = 0x4000, scoped, tag = 'input window, operand 2, single buffered']
    #allocation6 [shape = 's32[1]{0}', space=sflag, size = 0x4, scoped, tag = 'scoped memory for tpu_custom_call.1']
    #allocation7 [shape = 'u8[8192]{0}', space=vmem, size = 0x2000, scoped, tag = 'output window, operand 0, single buffered']
    %9 = vsyncpa [#allocation3], 0
    %10 = vsyncpa [#allocation6], 0
    %11 = vsyncpa [#allocation4], 0
    // Predicated region
    $region2: #{tpu_custom_call.1} parent=1 // pred_check
      _
    $region3: #{tpu_custom_call.1} parent=1 // pred_check_branch
      %13 = sbr.rel (0) target = $region5
    $region4: #{tpu_custom_call.1} parent=1 // pred_region
      %s15 = ssub.s32 256, 256
      %16 = vsyncadd [#allocation3], %s15
      %s17 = sshll.u32 [#allocation2], 4
      %s18 = int_to_ptr.vmem [resolvable:$true] %s17
      %23 = dma.hbm_to_vmem [thread:$0]  %s0, 256, %s18, [#allocation3], 128, 128, 8
    $region5: #{tpu_custom_call.1} parent=1 // pred_fallthru
      _
    // Predicated region
    $region6: #{tpu_custom_call.1} parent=1 // pred_check
      _
    $region7: #{tpu_custom_call.1} parent=1 // pred_check_branch
      %25 = sbr.rel (0) target = $region9
    $region8: #{tpu_custom_call.1} parent=1 // pred_region
      _
    $region9: #{tpu_custom_call.1} parent=1 // pred_fallthru
      _
    // Predicated region
    $region10: #{tpu_custom_call.1} parent=1 // pred_check
      _
    $region11: #{tpu_custom_call.1} parent=1 // pred_check_branch
      %27 = sbr.rel (0) target = $region13
    $region12: #{tpu_custom_call.1} parent=1 // pred_region
      %s29 = ssub.s32 512, 512
      %30 = vsyncadd [#allocation6], %s29
      %s31 = sshll.u32 [#allocation5], 4
      %s32 = int_to_ptr.vmem [resolvable:$true] %s31
      %37 = dma.hbm_to_vmem [thread:$0]  %s2, 512, %s32, [#allocation6], 128, 128, 8
    $region13: #{tpu_custom_call.1} parent=1 // pred_fallthru
      _
    // Predicated region
    $region14: #{tpu_custom_call.1} parent=1 // pred_check
      _
    $region15: #{tpu_custom_call.1} parent=1 // pred_check_branch
      %39 = sbr.rel (0) target = $region17
    $region16: #{tpu_custom_call.1} parent=1 // pred_region
      _
    $region17: #{tpu_custom_call.1} parent=1 // pred_fallthru
      _
    // Predicated region
    $region18: #{tpu_custom_call.1} parent=1 // pred_check
      _
    $region19: #{tpu_custom_call.1} parent=1 // pred_check_branch
      %41 = sbr.rel (0) target = $region21
    $region20: #{tpu_custom_call.1} parent=1 // pred_region
      %42 = dma.done [#allocation3], 256
    $region21: #{tpu_custom_call.1} parent=1 // pred_fallthru
      _
    // Predicated region
    $region22: #{tpu_custom_call.1} parent=1 // pred_check
      _
    $region23: #{tpu_custom_call.1} parent=1 // pred_check_branch
      %44 = sbr.rel (0) target = $region25
    $region24: #{tpu_custom_call.1} parent=1 // pred_region
      %45 = dma.done [#allocation6], 512
    $region25: #{tpu_custom_call.1} parent=1 // pred_fallthru
      _
    %v46 = vld [vmem:[#allocation2] sm:$0xff]
    %v47 = vld [vmem:[#allocation2 + $0x8] sm:$0xff]
    %v48 = vld [vmem:[#allocation5] sm:$0xff]
    %v49 = vld [vmem:[#allocation5 + $0x8] sm:$0xff]
    %v50 = vld [vmem:[#allocation5 + $0x10] sm:$0xff]
    %v51 = vld [vmem:[#allocation5 + $0x18] sm:$0xff]
    %v52 = vld [vmem:[%s3] sm:$0x1]
    %v54 = vlaneseq
    %v55 = vshrl.u32 %v54, 7
    %v56 = vsub.s32 0, %v55
    %v57 = vrot.slane %v52, %v56
    %vm59 = vcmask 261120
    %v61 = vsel %vm59, %v46, 0
    %v64 = vsel %vm59, %v47, 0
    %66 = vmatprep.subr.mxu0 0.0
    %67 = vmatpush1.msra.mxu0 %v48
    %68 = vmatprep.subr.mxu0 0.0
    %69 = vmatpush1.msra.mxu0 %v49
    %70 = vmatprep.subr.mxu0 0.0
    %71 = vmatpush1.msra.mxu0 %v50
    %72 = vmatprep.subr.mxu0 0.0
    %73 = vmatpush1.msra.mxu0 %v51
    %74 = vmatprep.subr.mxu0 0.0
    %75 = vmatpush1.msra.mxu0 0.0
    %76 = vmatprep.subr.mxu0 0.0
    %77 = vmatpush1.msra.mxu0 0.0
    %78 = vmatprep.subr.mxu0 0.0
    %79 = vmatpush1.msra.mxu0 0.0
    %80 = vmatprep.subr.mxu0 0.0
    %81 = vmatpush1.msra.mxu0 0.0
    %82 = vmatprep.subr.mxu0 0.0
    %83 = vmatpush1.msra.mxu0 0.0
    %84 = vmatprep.subr.mxu0 0.0
    %85 = vmatpush1.msra.mxu0 0.0
    %86 = vmatprep.subr.mxu0 0.0
    %87 = vmatpush1.msra.mxu0 0.0
    %88 = vmatprep.subr.mxu0 0.0
    %89 = vmatpush1.msra.mxu0 0.0
    %90 = vmatprep.subr.mxu0 0.0
    %91 = vmatpush1.msra.mxu0 0.0
    %92 = vmatprep.subr.mxu0 0.0
    %93 = vmatpush1.msra.mxu0 0.0
    %94 = vmatprep.subr.mxu0 0.0
    %95 = vmatpush1.msra.mxu0 0.0
    %96 = vmatprep.subr.mxu0 0.0
    %97 = vmatpush1.msra.mxu0 0.0
    %98 = vmatprep.subr.mxu0 0.0
    %99 = vmatpush1.msra.mxu0 0.0
    %100 = vmatprep.subr.mxu0 0.0
    %101 = vmatpush1.msra.mxu0 0.0
    %102 = vmatprep.subr.mxu0 0.0
    %103 = vmatpush1.msra.mxu0 0.0
    %104 = vmatprep.subr.mxu0 0.0
    %105 = vmatpush1.msra.mxu0 0.0
    %106 = vmatprep.subr.mxu0 0.0
    %107 = vmatpush1.msra.mxu0 0.0
    %108 = vmatprep.subr.mxu0 0.0
    %109 = vmatpush1.msra.mxu0 0.0
    %110 = vmatprep.subr.mxu0 0.0
    %111 = vmatpush1.msra.mxu0 0.0
    %112 = vmatprep.subr.mxu0 0.0
    %113 = vmatpush1.msra.mxu0 0.0
    %114 = vmatprep.subr.mxu0 0.0
    %115 = vmatpush1.msra.mxu0 0.0
    %116 = vmatprep.subr.mxu0 0.0
    %117 = vmatpush1.msra.mxu0 0.0
    %118 = vmatprep.subr.mxu0 0.0
    %119 = vmatpush1.msra.mxu0 0.0
    %120 = vmatprep.subr.mxu0 0.0
    %121 = vmatpush1.msra.mxu0 0.0
    %122 = vmatprep.subr.mxu0 0.0
    %123 = vmatpush1.msra.mxu0 0.0
    %124 = vmatprep.subr.mxu0 0.0
    %125 = vmatpush1.msra.mxu0 0.0
    %126 = vmatprep.subr.mxu0 0.0
    %127 = vmatpush1.msra.mxu0 0.0
    %128 = vmatprep.subr.mxu0 0.0
    %129 = vmatpush1.msra.mxu0 0.0
    %130 = vmatprep.mubr.f32.mxu0 0.0
    %131 = vmatmul.mubr.f32.gmra.mrb[0].mxu0 %v61
    %v132 = vpop.f32.mrb[0].mxu0
    %v133 = vadd.f32 %v57, %v132
    %v134 = vpop.f32.mrb[0].mxu0
    %135 = vmatprep.mubr.f32.mxu0 0.0
    %136 = vmatmul.mubr.f32.gmra.mrb[0].mxu0 %v64
    %v137 = vpop.f32.mrb[0].mxu0
    %v138 = vadd.f32 %v57, %v137
    %v139 = vpop.f32.mrb[0].mxu0
    %140 = vdwg.mxu0
    %143 = vrot.lane.b32.xlu0 %v133, 104
    %v144 = vpop.permute.xlu0 %143
    %145 = vrot.lane.b32.xlu0 %v138, 104
    %v146 = vpop.permute.xlu0 %145
    %147 = vrot.lane.b32.xlu0 %v133, 80
    %v148 = vpop.permute.xlu0 %147
    %149 = vrot.lane.b32.xlu0 %v138, 80
    %v150 = vpop.permute.xlu0 %149
    %151 = vrot.lane.b32.xlu0 %v133, 56
    %v152 = vpop.permute.xlu0 %151
    %153 = vrot.lane.b32.xlu0 %v138, 56
    %v154 = vpop.permute.xlu0 %153
    %v155 = vld [vmem:[%s1] sm:$0x1]
    %v156 = vld [vmem:[%s1 + $0x1] sm:$0x1]
    %v157 = vsub.f32 1.0, %v155
    %v158 = vsub.f32 1.0, %v156
    %v159 = vmul.f32 %v157, -10000.0
    %v160 = vmul.f32 %v158, -10000.0
    %v163 = vlaneseq
    %v164 = vshrl.u32 %v163, 7
    %v165 = vsub.s32 0, %v164
    %v166 = vrot.slane %v159, %v165
    %v167 = vlaneseq
    %v168 = vshrl.u32 %v167, 7
    %v169 = vsub.s32 0, %v168
    %v170 = vrot.slane %v160, %v169
    %173 = vrot.lane.b32.xlu0 %v133, 120
    %v174 = vpop.permute.xlu0 %173
    %vm175 = vcmask 64512
    %v176 = vsel %vm175, %v133, 0
    %v178 = vsel %vm175, %v174, 0
    %180 = vmatprep.subr.mxu0 0.0
    %181 = vmatpush1.xpose.msra.mxu0 %v178
    %182 = vmatprep.subr.mxu0 0.0
    %183 = vmatpush1.xpose.msra.mxu0 0.0
    %184 = vmatprep.subr.mxu0 0.0
    %185 = vmatpush1.xpose.msra.mxu0 0.0
    %186 = vmatprep.subr.mxu0 0.0
    %187 = vmatpush1.xpose.msra.mxu0 0.0
    %188 = vmatprep.subr.mxu0 0.0
    %189 = vmatpush1.xpose.msra.mxu0 0.0
    %190 = vmatprep.subr.mxu0 0.0
    %191 = vmatpush1.xpose.msra.mxu0 0.0
    %192 = vmatprep.subr.mxu0 0.0
    %193 = vmatpush1.xpose.msra.mxu0 0.0
    %194 = vmatprep.subr.mxu0 0.0
    %195 = vmatpush1.xpose.msra.mxu0 0.0
    %196 = vmatprep.subr.mxu0 0.0
    %197 = vmatpush1.xpose.msra.mxu0 0.0
    %198 = vmatprep.subr.mxu0 0.0
    %199 = vmatpush1.xpose.msra.mxu0 0.0
    %200 = vmatprep.subr.mxu0 0.0
    %201 = vmatpush1.xpose.msra.mxu0 0.0
    %202 = vmatprep.subr.mxu0 0.0
    %203 = vmatpush1.xpose.msra.mxu0 0.0
    %204 = vmatprep.subr.mxu0 0.0
    %205 = vmatpush1.xpose.msra.mxu0 0.0
    %206 = vmatprep.subr.mxu0 0.0
    %207 = vmatpush1.xpose.msra.mxu0 0.0
    %208 = vmatprep.subr.mxu0 0.0
    %209 = vmatpush1.xpose.msra.mxu0 0.0
    %210 = vmatprep.subr.mxu0 0.0
    %211 = vmatpush1.xpose.msra.mxu0 0.0
    %212 = vmatprep.subr.mxu0 0.0
    %213 = vmatpush1.xpose.msra.mxu0 0.0
    %214 = vmatprep.subr.mxu0 0.0
    %215 = vmatpush1.xpose.msra.mxu0 0.0
    %216 = vmatprep.subr.mxu0 0.0
    %217 = vmatpush1.xpose.msra.mxu0 0.0
    %218 = vmatprep.subr.mxu0 0.0
    %219 = vmatpush1.xpose.msra.mxu0 0.0
    %220 = vmatprep.subr.mxu0 0.0
    %221 = vmatpush1.xpose.msra.mxu0 0.0
    %222 = vmatprep.subr.mxu0 0.0
    %223 = vmatpush1.xpose.msra.mxu0 0.0
    %224 = vmatprep.subr.mxu0 0.0
    %225 = vmatpush1.xpose.msra.mxu0 0.0
    %226 = vmatprep.subr.mxu0 0.0
    %227 = vmatpush1.xpose.msra.mxu0 0.0
    %228 = vmatprep.subr.mxu0 0.0
    %229 = vmatpush1.xpose.msra.mxu0 0.0
    %230 = vmatprep.subr.mxu0 0.0
    %231 = vmatpush1.xpose.msra.mxu0 0.0
    %232 = vmatprep.subr.mxu0 0.0
    %233 = vmatpush1.xpose.msra.mxu0 0.0
    %234 = vmatprep.subr.mxu0 0.0
    %235 = vmatpush1.xpose.msra.mxu0 0.0
    %236 = vmatprep.subr.mxu0 0.0
    %237 = vmatpush1.xpose.msra.mxu0 0.0
    %238 = vmatprep.subr.mxu0 0.0
    %239 = vmatpush1.xpose.msra.mxu0 0.0
    %240 = vmatprep.subr.mxu0 0.0
    %241 = vmatpush1.xpose.msra.mxu0 0.0
    %242 = vmatprep.subr.mxu0 0.0
    %243 = vmatpush1.xpose.msra.mxu0 0.0
    %244 = vmatprep.mubr.f32.mxu0 0.0
    %245 = vmatmul.mubr.f32.gmra.mrb[0].mxu0 %v176
    %v246 = vpop.f32.mrb[0].mxu0
    %v247 = vadd.f32 %v166, %v246
    %v248 = vpop.f32.mrb[0].mxu0
    %249 = vdwg.mxu0
    %250 = vrot.lane.b32.xlu0 %v138, 120
    %v251 = vpop.permute.xlu0 %250
    %v252 = vsel %vm175, %v138, 0
    %v254 = vsel %vm175, %v251, 0
    %256 = vmatprep.subr.mxu0 0.0
    %257 = vmatpush1.xpose.msra.mxu0 %v254
    %258 = vmatprep.subr.mxu0 0.0
    %259 = vmatpush1.xpose.msra.mxu0 0.0
    %260 = vmatprep.subr.mxu0 0.0
    %261 = vmatpush1.xpose.msra.mxu0 0.0
    %262 = vmatprep.subr.mxu0 0.0
    %263 = vmatpush1.xpose.msra.mxu0 0.0
    %264 = vmatprep.subr.mxu0 0.0
    %265 = vmatpush1.xpose.msra.mxu0 0.0
    %266 = vmatprep.subr.mxu0 0.0
    %267 = vmatpush1.xpose.msra.mxu0 0.0
    %268 = vmatprep.subr.mxu0 0.0
    %269 = vmatpush1.xpose.msra.mxu0 0.0
    %270 = vmatprep.subr.mxu0 0.0
    %271 = vmatpush1.xpose.msra.mxu0 0.0
    %272 = vmatprep.subr.mxu0 0.0
    %273 = vmatpush1.xpose.msra.mxu0 0.0
    %274 = vmatprep.subr.mxu0 0.0
    %275 = vmatpush1.xpose.msra.mxu0 0.0
    %276 = vmatprep.subr.mxu0 0.0
    %277 = vmatpush1.xpose.msra.mxu0 0.0
    %278 = vmatprep.subr.mxu0 0.0
    %279 = vmatpush1.xpose.msra.mxu0 0.0
    %280 = vmatprep.subr.mxu0 0.0
    %281 = vmatpush1.xpose.msra.mxu0 0.0
    %282 = vmatprep.subr.mxu0 0.0
    %283 = vmatpush1.xpose.msra.mxu0 0.0
    %284 = vmatprep.subr.mxu0 0.0
    %285 = vmatpush1.xpose.msra.mxu0 0.0
    %286 = vmatprep.subr.mxu0 0.0
    %287 = vmatpush1.xpose.msra.mxu0 0.0
    %288 = vmatprep.subr.mxu0 0.0
    %289 = vmatpush1.xpose.msra.mxu0 0.0
    %290 = vmatprep.subr.mxu0 0.0
    %291 = vmatpush1.xpose.msra.mxu0 0.0
    %292 = vmatprep.subr.mxu0 0.0
    %293 = vmatpush1.xpose.msra.mxu0 0.0
    %294 = vmatprep.subr.mxu0 0.0
    %295 = vmatpush1.xpose.msra.mxu0 0.0
    %296 = vmatprep.subr.mxu0 0.0
    %297 = vmatpush1.xpose.msra.mxu0 0.0
    %298 = vmatprep.subr.mxu0 0.0
    %299 = vmatpush1.xpose.msra.mxu0 0.0
    %300 = vmatprep.subr.mxu0 0.0
    %301 = vmatpush1.xpose.msra.mxu0 0.0
    %302 = vmatprep.subr.mxu0 0.0
    %303 = vmatpush1.xpose.msra.mxu0 0.0
    %304 = vmatprep.subr.mxu0 0.0
    %305 = vmatpush1.xpose.msra.mxu0 0.0
    %306 = vmatprep.subr.mxu0 0.0
    %307 = vmatpush1.xpose.msra.mxu0 0.0
    %308 = vmatprep.subr.mxu0 0.0
    %309 = vmatpush1.xpose.msra.mxu0 0.0
    %310 = vmatprep.subr.mxu0 0.0
    %311 = vmatpush1.xpose.msra.mxu0 0.0
    %312 = vmatprep.subr.mxu0 0.0
    %313 = vmatpush1.xpose.msra.mxu0 0.0
    %314 = vmatprep.subr.mxu0 0.0
    %315 = vmatpush1.xpose.msra.mxu0 0.0
    %316 = vmatprep.subr.mxu0 0.0
    %317 = vmatpush1.xpose.msra.mxu0 0.0
    %318 = vmatprep.subr.mxu0 0.0
    %319 = vmatpush1.xpose.msra.mxu0 0.0
    %320 = vmatprep.mubr.f32.mxu0 0.0
    %321 = vmatmul.mubr.f32.gmra.mrb[0].mxu0 %v252
    %v322 = vpop.f32.mrb[0].mxu0
    %v323 = vadd.f32 %v170, %v322
    %v324 = vpop.f32.mrb[0].mxu0
    %325 = vdwg.mxu0
    %326 = vrot.lane.b32.xlu0 %v144, 120
    %v327 = vpop.permute.xlu0 %326
    %v328 = vsel %vm175, %v144, 0
    %v330 = vsel %vm175, %v327, 0
    %332 = vmatprep.subr.mxu0 0.0
    %333 = vmatpush1.xpose.msra.mxu0 %v330
    %334 = vmatprep.subr.mxu0 0.0
    %335 = vmatpush1.xpose.msra.mxu0 0.0
    %336 = vmatprep.subr.mxu0 0.0
    %337 = vmatpush1.xpose.msra.mxu0 0.0
    %338 = vmatprep.subr.mxu0 0.0
    %339 = vmatpush1.xpose.msra.mxu0 0.0
    %340 = vmatprep.subr.mxu0 0.0
    %341 = vmatpush1.xpose.msra.mxu0 0.0
    %342 = vmatprep.subr.mxu0 0.0
    %343 = vmatpush1.xpose.msra.mxu0 0.0
    %344 = vmatprep.subr.mxu0 0.0
    %345 = vmatpush1.xpose.msra.mxu0 0.0
    %346 = vmatprep.subr.mxu0 0.0
    %347 = vmatpush1.xpose.msra.mxu0 0.0
    %348 = vmatprep.subr.mxu0 0.0
    %349 = vmatpush1.xpose.msra.mxu0 0.0
    %350 = vmatprep.subr.mxu0 0.0
    %351 = vmatpush1.xpose.msra.mxu0 0.0
    %352 = vmatprep.subr.mxu0 0.0
    %353 = vmatpush1.xpose.msra.mxu0 0.0
    %354 = vmatprep.subr.mxu0 0.0
    %355 = vmatpush1.xpose.msra.mxu0 0.0
    %356 = vmatprep.subr.mxu0 0.0
    %357 = vmatpush1.xpose.msra.mxu0 0.0
    %358 = vmatprep.subr.mxu0 0.0
    %359 = vmatpush1.xpose.msra.mxu0 0.0
    %360 = vmatprep.subr.mxu0 0.0
    %361 = vmatpush1.xpose.msra.mxu0 0.0
    %362 = vmatprep.subr.mxu0 0.0
    %363 = vmatpush1.xpose.msra.mxu0 0.0
    %364 = vmatprep.subr.mxu0 0.0
    %365 = vmatpush1.xpose.msra.mxu0 0.0
    %366 = vmatprep.subr.mxu0 0.0
    %367 = vmatpush1.xpose.msra.mxu0 0.0
    %368 = vmatprep.subr.mxu0 0.0
    %369 = vmatpush1.xpose.msra.mxu0 0.0
    %370 = vmatprep.subr.mxu0 0.0
    %371 = vmatpush1.xpose.msra.mxu0 0.0
    %372 = vmatprep.subr.mxu0 0.0
    %373 = vmatpush1.xpose.msra.mxu0 0.0
    %374 = vmatprep.subr.mxu0 0.0
    %375 = vmatpush1.xpose.msra.mxu0 0.0
    %376 = vmatprep.subr.mxu0 0.0
    %377 = vmatpush1.xpose.msra.mxu0 0.0
    %378 = vmatprep.subr.mxu0 0.0
    %379 = vmatpush1.xpose.msra.mxu0 0.0
    %380 = vmatprep.subr.mxu0 0.0
    %381 = vmatpush1.xpose.msra.mxu0 0.0
    %382 = vmatprep.subr.mxu0 0.0
    %383 = vmatpush1.xpose.msra.mxu0 0.0
    %384 = vmatprep.subr.mxu0 0.0
    %385 = vmatpush1.xpose.msra.mxu0 0.0
    %386 = vmatprep.subr.mxu0 0.0
    %387 = vmatpush1.xpose.msra.mxu0 0.0
    %388 = vmatprep.subr.mxu0 0.0
    %389 = vmatpush1.xpose.msra.mxu0 0.0
    %390 = vmatprep.subr.mxu0 0.0
    %391 = vmatpush1.xpose.msra.mxu0 0.0
    %392 = vmatprep.subr.mxu0 0.0
    %393 = vmatpush1.xpose.msra.mxu0 0.0
    %394 = vmatprep.subr.mxu0 0.0
    %395 = vmatpush1.xpose.msra.mxu0 0.0
    %396 = vmatprep.mubr.f32.mxu0 0.0
    %397 = vmatmul.mubr.f32.gmra.mrb[0].mxu0 %v328
    %v398 = vpop.f32.mrb[0].mxu0
    %v399 = vadd.f32 %v166, %v398
    %v400 = vpop.f32.mrb[0].mxu0
    %401 = vdwg.mxu0
    %402 = vrot.lane.b32.xlu0 %v146, 120
    %v403 = vpop.permute.xlu0 %402
    %v404 = vsel %vm175, %v146, 0
    %v406 = vsel %vm175, %v403, 0
    %408 = vmatprep.subr.mxu0 0.0
    %409 = vmatpush1.xpose.msra.mxu0 %v406
    %410 = vmatprep.subr.mxu0 0.0
    %411 = vmatpush1.xpose.msra.mxu0 0.0
    %412 = vmatprep.subr.mxu0 0.0
    %413 = vmatpush1.xpose.msra.mxu0 0.0
    %414 = vmatprep.subr.mxu0 0.0
    %415 = vmatpush1.xpose.msra.mxu0 0.0
    %416 = vmatprep.subr.mxu0 0.0
    %417 = vmatpush1.xpose.msra.mxu0 0.0
    %418 = vmatprep.subr.mxu0 0.0
    %419 = vmatpush1.xpose.msra.mxu0 0.0
    %420 = vmatprep.subr.mxu0 0.0
    %421 = vmatpush1.xpose.msra.mxu0 0.0
    %422 = vmatprep.subr.mxu0 0.0
    %423 = vmatpush1.xpose.msra.mxu0 0.0
    %424 = vmatprep.subr.mxu0 0.0
    %425 = vmatpush1.xpose.msra.mxu0 0.0
    %426 = vmatprep.subr.mxu0 0.0
    %427 = vmatpush1.xpose.msra.mxu0 0.0
    %428 = vmatprep.subr.mxu0 0.0
    %429 = vmatpush1.xpose.msra.mxu0 0.0
    %430 = vmatprep.subr.mxu0 0.0
    %431 = vmatpush1.xpose.msra.mxu0 0.0
    %432 = vmatprep.subr.mxu0 0.0
    %433 = vmatpush1.xpose.msra.mxu0 0.0
    %434 = vmatprep.subr.mxu0 0.0
    %435 = vmatpush1.xpose.msra.mxu0 0.0
    %436 = vmatprep.subr.mxu0 0.0
    %437 = vmatpush1.xpose.msra.mxu0 0.0
    %438 = vmatprep.subr.mxu0 0.0
    %439 = vmatpush1.xpose.msra.mxu0 0.0
    %440 = vmatprep.subr.mxu0 0.0
    %441 = vmatpush1.xpose.msra.mxu0 0.0
    %442 = vmatprep.subr.mxu0 0.0
    %443 = vmatpush1.xpose.msra.mxu0 0.0
    %444 = vmatprep.subr.mxu0 0.0
    %445 = vmatpush1.xpose.msra.mxu0 0.0
    %446 = vmatprep.subr.mxu0 0.0
    %447 = vmatpush1.xpose.msra.mxu0 0.0
    %448 = vmatprep.subr.mxu0 0.0
    %449 = vmatpush1.xpose.msra.mxu0 0.0
    %450 = vmatprep.subr.mxu0 0.0
    %451 = vmatpush1.xpose.msra.mxu0 0.0
    %452 = vmatprep.subr.mxu0 0.0
    %453 = vmatpush1.xpose.msra.mxu0 0.0
    %454 = vmatprep.subr.mxu0 0.0
    %455 = vmatpush1.xpose.msra.mxu0 0.0
    %456 = vmatprep.subr.mxu0 0.0
    %457 = vmatpush1.xpose.msra.mxu0 0.0
    %458 = vmatprep.subr.mxu0 0.0
    %459 = vmatpush1.xpose.msra.mxu0 0.0
    %460 = vmatprep.subr.mxu0 0.0
    %461 = vmatpush1.xpose.msra.mxu0 0.0
    %462 = vmatprep.subr.mxu0 0.0
    %463 = vmatpush1.xpose.msra.mxu0 0.0
    %464 = vmatprep.subr.mxu0 0.0
    %465 = vmatpush1.xpose.msra.mxu0 0.0
    %466 = vmatprep.subr.mxu0 0.0
    %467 = vmatpush1.xpose.msra.mxu0 0.0
    %468 = vmatprep.subr.mxu0 0.0
    %469 = vmatpush1.xpose.msra.mxu0 0.0
    %470 = vmatprep.subr.mxu0 0.0
    %471 = vmatpush1.xpose.msra.mxu0 0.0
    %472 = vmatprep.mubr.f32.mxu0 0.0
    %473 = vmatmul.mubr.f32.gmra.mrb[0].mxu0 %v404
    %v474 = vpop.f32.mrb[0].mxu0
    %v475 = vadd.f32 %v170, %v474
    %v476 = vpop.f32.mrb[0].mxu0
    %477 = vdwg.mxu0
    %478 = vrot.lane.b32.xlu0 %v148, 120
    %v479 = vpop.permute.xlu0 %478
    %v480 = vsel %vm175, %v148, 0
    %v482 = vsel %vm175, %v479, 0
    %484 = vmatprep.subr.mxu0 0.0
    %485 = vmatpush1.xpose.msra.mxu0 %v482
    %486 = vmatprep.subr.mxu0 0.0
    %487 = vmatpush1.xpose.msra.mxu0 0.0
    %488 = vmatprep.subr.mxu0 0.0
    %489 = vmatpush1.xpose.msra.mxu0 0.0
    %490 = vmatprep.subr.mxu0 0.0
    %491 = vmatpush1.xpose.msra.mxu0 0.0
    %492 = vmatprep.subr.mxu0 0.0
    %493 = vmatpush1.xpose.msra.mxu0 0.0
    %494 = vmatprep.subr.mxu0 0.0
    %495 = vmatpush1.xpose.msra.mxu0 0.0
    %496 = vmatprep.subr.mxu0 0.0
    %497 = vmatpush1.xpose.msra.mxu0 0.0
    %498 = vmatprep.subr.mxu0 0.0
    %499 = vmatpush1.xpose.msra.mxu0 0.0
    %500 = vmatprep.subr.mxu0 0.0
    %501 = vmatpush1.xpose.msra.mxu0 0.0
    %502 = vmatprep.subr.mxu0 0.0
    %503 = vmatpush1.xpose.msra.mxu0 0.0
    %504 = vmatprep.subr.mxu0 0.0
    %505 = vmatpush1.xpose.msra.mxu0 0.0
    %506 = vmatprep.subr.mxu0 0.0
    %507 = vmatpush1.xpose.msra.mxu0 0.0
    %508 = vmatprep.subr.mxu0 0.0
    %509 = vmatpush1.xpose.msra.mxu0 0.0
    %510 = vmatprep.subr.mxu0 0.0
    %511 = vmatpush1.xpose.msra.mxu0 0.0
    %512 = vmatprep.subr.mxu0 0.0
    %513 = vmatpush1.xpose.msra.mxu0 0.0
    %514 = vmatprep.subr.mxu0 0.0
    %515 = vmatpush1.xpose.msra.mxu0 0.0
    %516 = vmatprep.subr.mxu0 0.0
    %517 = vmatpush1.xpose.msra.mxu0 0.0
    %518 = vmatprep.subr.mxu0 0.0
    %519 = vmatpush1.xpose.msra.mxu0 0.0
    %520 = vmatprep.subr.mxu0 0.0
    %521 = vmatpush1.xpose.msra.mxu0 0.0
    %522 = vmatprep.subr.mxu0 0.0
    %523 = vmatpush1.xpose.msra.mxu0 0.0
    %524 = vmatprep.subr.mxu0 0.0
    %525 = vmatpush1.xpose.msra.mxu0 0.0
    %526 = vmatprep.subr.mxu0 0.0
    %527 = vmatpush1.xpose.msra.mxu0 0.0
    %528 = vmatprep.subr.mxu0 0.0
    %529 = vmatpush1.xpose.msra.mxu0 0.0
    %530 = vmatprep.subr.mxu0 0.0
    %531 = vmatpush1.xpose.msra.mxu0 0.0
    %532 = vmatprep.subr.mxu0 0.0
    %533 = vmatpush1.xpose.msra.mxu0 0.0
    %534 = vmatprep.subr.mxu0 0.0
    %535 = vmatpush1.xpose.msra.mxu0 0.0
    %536 = vmatprep.subr.mxu0 0.0
    %537 = vmatpush1.xpose.msra.mxu0 0.0
    %538 = vmatprep.subr.mxu0 0.0
    %539 = vmatpush1.xpose.msra.mxu0 0.0
    %540 = vmatprep.subr.mxu0 0.0
    %541 = vmatpush1.xpose.msra.mxu0 0.0
    %542 = vmatprep.subr.mxu0 0.0
    %543 = vmatpush1.xpose.msra.mxu0 0.0
    %544 = vmatprep.subr.mxu0 0.0
    %545 = vmatpush1.xpose.msra.mxu0 0.0
    %546 = vmatprep.subr.mxu0 0.0
    %547 = vmatpush1.xpose.msra.mxu0 0.0
    %548 = vmatprep.mubr.f32.mxu0 0.0
    %549 = vmatmul.mubr.f32.gmra.mrb[0].mxu0 %v480
    %v550 = vpop.f32.mrb[0].mxu0
    %v551 = vadd.f32 %v166, %v550
    %v552 = vpop.f32.mrb[0].mxu0
    %553 = vdwg.mxu0
    %554 = vrot.lane.b32.xlu0 %v150, 120
    %v555 = vpop.permute.xlu0 %554
    %v556 = vsel %vm175, %v150, 0
    %v558 = vsel %vm175, %v555, 0
    %560 = vmatprep.subr.mxu0 0.0
    %561 = vmatpush1.xpose.msra.mxu0 %v558
    %562 = vmatprep.subr.mxu0 0.0
    %563 = vmatpush1.xpose.msra.mxu0 0.0
    %564 = vmatprep.subr.mxu0 0.0
    %565 = vmatpush1.xpose.msra.mxu0 0.0
    %566 = vmatprep.subr.mxu0 0.0
    %567 = vmatpush1.xpose.msra.mxu0 0.0
    %568 = vmatprep.subr.mxu0 0.0
    %569 = vmatpush1.xpose.msra.mxu0 0.0
    %570 = vmatprep.subr.mxu0 0.0
    %571 = vmatpush1.xpose.msra.mxu0 0.0
    %572 = vmatprep.subr.mxu0 0.0
    %573 = vmatpush1.xpose.msra.mxu0 0.0
    %574 = vmatprep.subr.mxu0 0.0
    %575 = vmatpush1.xpose.msra.mxu0 0.0
    %576 = vmatprep.subr.mxu0 0.0
    %577 = vmatpush1.xpose.msra.mxu0 0.0
    %578 = vmatprep.subr.mxu0 0.0
    %579 = vmatpush1.xpose.msra.mxu0 0.0
    %580 = vmatprep.subr.mxu0 0.0
    %581 = vmatpush1.xpose.msra.mxu0 0.0
    %582 = vmatprep.subr.mxu0 0.0
    %583 = vmatpush1.xpose.msra.mxu0 0.0
    %584 = vmatprep.subr.mxu0 0.0
    %585 = vmatpush1.xpose.msra.mxu0 0.0
    %586 = vmatprep.subr.mxu0 0.0
    %587 = vmatpush1.xpose.msra.mxu0 0.0
    %588 = vmatprep.subr.mxu0 0.0
    %589 = vmatpush1.xpose.msra.mxu0 0.0
    %590 = vmatprep.subr.mxu0 0.0
    %591 = vmatpush1.xpose.msra.mxu0 0.0
    %592 = vmatprep.subr.mxu0 0.0
    %593 = vmatpush1.xpose.msra.mxu0 0.0
    %594 = vmatprep.subr.mxu0 0.0
    %595 = vmatpush1.xpose.msra.mxu0 0.0
    %596 = vmatprep.subr.mxu0 0.0
    %597 = vmatpush1.xpose.msra.mxu0 0.0
    %598 = vmatprep.subr.mxu0 0.0
    %599 = vmatpush1.xpose.msra.mxu0 0.0
    %600 = vmatprep.subr.mxu0 0.0
    %601 = vmatpush1.xpose.msra.mxu0 0.0
    %602 = vmatprep.subr.mxu0 0.0
    %603 = vmatpush1.xpose.msra.mxu0 0.0
    %604 = vmatprep.subr.mxu0 0.0
    %605 = vmatpush1.xpose.msra.mxu0 0.0
    %606 = vmatprep.subr.mxu0 0.0
    %607 = vmatpush1.xpose.msra.mxu0 0.0
    %608 = vmatprep.subr.mxu0 0.0
    %609 = vmatpush1.xpose.msra.mxu0 0.0
    %610 = vmatprep.subr.mxu0 0.0
    %611 = vmatpush1.xpose.msra.mxu0 0.0
    %612 = vmatprep.subr.mxu0 0.0
    %613 = vmatpush1.xpose.msra.mxu0 0.0
    %614 = vmatprep.subr.mxu0 0.0
    %615 = vmatpush1.xpose.msra.mxu0 0.0
    %616 = vmatprep.subr.mxu0 0.0
    %617 = vmatpush1.xpose.msra.mxu0 0.0
    %618 = vmatprep.subr.mxu0 0.0
    %619 = vmatpush1.xpose.msra.mxu0 0.0
    %620 = vmatprep.subr.mxu0 0.0
    %621 = vmatpush1.xpose.msra.mxu0 0.0
    %622 = vmatprep.subr.mxu0 0.0
    %623 = vmatpush1.xpose.msra.mxu0 0.0
    %624 = vmatprep.mubr.f32.mxu0 0.0
    %625 = vmatmul.mubr.f32.gmra.mrb[0].mxu0 %v556
    %v626 = vpop.f32.mrb[0].mxu0
    %v627 = vadd.f32 %v170, %v626
    %v628 = vpop.f32.mrb[0].mxu0
    %629 = vdwg.mxu0
    %630 = vrot.lane.b32.xlu0 %v152, 120
    %v631 = vpop.permute.xlu0 %630
    %v632 = vsel %vm175, %v152, 0
    %v634 = vsel %vm175, %v631, 0
    %636 = vmatprep.subr.mxu0 0.0
    %637 = vmatpush1.xpose.msra.mxu0 %v634
    %638 = vmatprep.subr.mxu0 0.0
    %639 = vmatpush1.xpose.msra.mxu0 0.0
    %640 = vmatprep.subr.mxu0 0.0
    %641 = vmatpush1.xpose.msra.mxu0 0.0
    %642 = vmatprep.subr.mxu0 0.0
    %643 = vmatpush1.xpose.msra.mxu0 0.0
    %644 = vmatprep.subr.mxu0 0.0
    %645 = vmatpush1.xpose.msra.mxu0 0.0
    %646 = vmatprep.subr.mxu0 0.0
    %647 = vmatpush1.xpose.msra.mxu0 0.0
    %648 = vmatprep.subr.mxu0 0.0
    %649 = vmatpush1.xpose.msra.mxu0 0.0
    %650 = vmatprep.subr.mxu0 0.0
    %651 = vmatpush1.xpose.msra.mxu0 0.0
    %652 = vmatprep.subr.mxu0 0.0
    %653 = vmatpush1.xpose.msra.mxu0 0.0
    %654 = vmatprep.subr.mxu0 0.0
    %655 = vmatpush1.xpose.msra.mxu0 0.0
    %656 = vmatprep.subr.mxu0 0.0
    %657 = vmatpush1.xpose.msra.mxu0 0.0
    %658 = vmatprep.subr.mxu0 0.0
    %659 = vmatpush1.xpose.msra.mxu0 0.0
    %660 = vmatprep.subr.mxu0 0.0
    %661 = vmatpush1.xpose.msra.mxu0 0.0
    %662 = vmatprep.subr.mxu0 0.0
    %663 = vmatpush1.xpose.msra.mxu0 0.0
    %664 = vmatprep.subr.mxu0 0.0
    %665 = vmatpush1.xpose.msra.mxu0 0.0
    %666 = vmatprep.subr.mxu0 0.0
    %667 = vmatpush1.xpose.msra.mxu0 0.0
    %668 = vmatprep.subr.mxu0 0.0
    %669 = vmatpush1.xpose.msra.mxu0 0.0
    %670 = vmatprep.subr.mxu0 0.0
    %671 = vmatpush1.xpose.msra.mxu0 0.0
    %672 = vmatprep.subr.mxu0 0.0
    %673 = vmatpush1.xpose.msra.mxu0 0.0
    %674 = vmatprep.subr.mxu0 0.0
    %675 = vmatpush1.xpose.msra.mxu0 0.0
    %676 = vmatprep.subr.mxu0 0.0
    %677 = vmatpush1.xpose.msra.mxu0 0.0
    %678 = vmatprep.subr.mxu0 0.0
    %679 = vmatpush1.xpose.msra.mxu0 0.0
    %680 = vmatprep.subr.mxu0 0.0
    %681 = vmatpush1.xpose.msra.mxu0 0.0
    %682 = vmatprep.subr.mxu0 0.0
    %683 = vmatpush1.xpose.msra.mxu0 0.0
    %684 = vmatprep.subr.mxu0 0.0
    %685 = vmatpush1.xpose.msra.mxu0 0.0
    %686 = vmatprep.subr.mxu0 0.0
    %687 = vmatpush1.xpose.msra.mxu0 0.0
    %688 = vmatprep.subr.mxu0 0.0
    %689 = vmatpush1.xpose.msra.mxu0 0.0
    %690 = vmatprep.subr.mxu0 0.0
    %691 = vmatpush1.xpose.msra.mxu0 0.0
    %692 = vmatprep.subr.mxu0 0.0
    %693 = vmatpush1.xpose.msra.mxu0 0.0
    %694 = vmatprep.subr.mxu0 0.0
    %695 = vmatpush1.xpose.msra.mxu0 0.0
    %696 = vmatprep.subr.mxu0 0.0
    %697 = vmatpush1.xpose.msra.mxu0 0.0
    %698 = vmatprep.subr.mxu0 0.0
    %699 = vmatpush1.xpose.msra.mxu0 0.0
    %700 = vmatprep.mubr.f32.mxu0 0.0
    %701 = vmatmul.mubr.f32.gmra.mrb[0].mxu0 %v632
    %v702 = vpop.f32.mrb[0].mxu0
    %v703 = vadd.f32 %v166, %v702
    %v704 = vpop.f32.mrb[0].mxu0
    %705 = vdwg.mxu0
    %706 = vrot.lane.b32.xlu0 %v154, 120
    %v707 = vpop.permute.xlu0 %706
    %v708 = vsel %vm175, %v154, 0
    %v710 = vsel %vm175, %v707, 0
    %712 = vmatprep.subr.mxu0 0.0
    %713 = vmatpush1.xpose.msra.mxu0 %v710
    %714 = vmatprep.subr.mxu0 0.0
    %715 = vmatpush1.xpose.msra.mxu0 0.0
    %716 = vmatprep.subr.mxu0 0.0
    %717 = vmatpush1.xpose.msra.mxu0 0.0
    %718 = vmatprep.subr.mxu0 0.0
    %719 = vmatpush1.xpose.msra.mxu0 0.0
    %720 = vmatprep.subr.mxu0 0.0
    %721 = vmatpush1.xpose.msra.mxu0 0.0
    %722 = vmatprep.subr.mxu0 0.0
    %723 = vmatpush1.xpose.msra.mxu0 0.0
    %724 = vmatprep.subr.mxu0 0.0
    %725 = vmatpush1.xpose.msra.mxu0 0.0
    %726 = vmatprep.subr.mxu0 0.0
    %727 = vmatpush1.xpose.msra.mxu0 0.0
    %728 = vmatprep.subr.mxu0 0.0
    %729 = vmatpush1.xpose.msra.mxu0 0.0
    %730 = vmatprep.subr.mxu0 0.0
    %731 = vmatpush1.xpose.msra.mxu0 0.0
    %732 = vmatprep.subr.mxu0 0.0
    %733 = vmatpush1.xpose.msra.mxu0 0.0
    %734 = vmatprep.subr.mxu0 0.0
    %735 = vmatpush1.xpose.msra.mxu0 0.0
    %736 = vmatprep.subr.mxu0 0.0
    %737 = vmatpush1.xpose.msra.mxu0 0.0
    %738 = vmatprep.subr.mxu0 0.0
    %739 = vmatpush1.xpose.msra.mxu0 0.0
    %740 = vmatprep.subr.mxu0 0.0
    %741 = vmatpush1.xpose.msra.mxu0 0.0
    %742 = vmatprep.subr.mxu0 0.0
    %743 = vmatpush1.xpose.msra.mxu0 0.0
    %744 = vmatprep.subr.mxu0 0.0
    %745 = vmatpush1.xpose.msra.mxu0 0.0
    %746 = vmatprep.subr.mxu0 0.0
    %747 = vmatpush1.xpose.msra.mxu0 0.0
    %748 = vmatprep.subr.mxu0 0.0
    %749 = vmatpush1.xpose.msra.mxu0 0.0
    %750 = vmatprep.subr.mxu0 0.0
    %751 = vmatpush1.xpose.msra.mxu0 0.0
    %752 = vmatprep.subr.mxu0 0.0
    %753 = vmatpush1.xpose.msra.mxu0 0.0
    %754 = vmatprep.subr.mxu0 0.0
    %755 = vmatpush1.xpose.msra.mxu0 0.0
    %756 = vmatprep.subr.mxu0 0.0
    %757 = vmatpush1.xpose.msra.mxu0 0.0
    %758 = vmatprep.subr.mxu0 0.0
    %759 = vmatpush1.xpose.msra.mxu0 0.0
    %760 = vmatprep.subr.mxu0 0.0
    %761 = vmatpush1.xpose.msra.mxu0 0.0
    %762 = vmatprep.subr.mxu0 0.0
    %763 = vmatpush1.xpose.msra.mxu0 0.0
    %764 = vmatprep.subr.mxu0 0.0
    %765 = vmatpush1.xpose.msra.mxu0 0.0
    %766 = vmatprep.subr.mxu0 0.0
    %767 = vmatpush1.xpose.msra.mxu0 0.0
    %768 = vmatprep.subr.mxu0 0.0
    %769 = vmatpush1.xpose.msra.mxu0 0.0
    %770 = vmatprep.subr.mxu0 0.0
    %771 = vmatpush1.xpose.msra.mxu0 0.0
    %772 = vmatprep.subr.mxu0 0.0
    %773 = vmatpush1.xpose.msra.mxu0 0.0
    %774 = vmatprep.subr.mxu0 0.0
    %775 = vmatpush1.xpose.msra.mxu0 0.0
    %776 = vmatprep.mubr.f32.mxu0 0.0
    %777 = vmatmul.mubr.f32.gmra.mrb[0].mxu0 %v708
    %v778 = vpop.f32.mrb[0].mxu0
    %v779 = vadd.f32 %v170, %v778
    %v780 = vpop.f32.mrb[0].mxu0
    %781 = vdwg.mxu0
    %v782 = vsel %vm175, %v247, -inf
    %783 = vmax.xlane.f32.xlu0 %v782
    %v784 = vpop.xlane.xlu0 %783
    %v785 = vsel %vm175, %v323, -inf
    %786 = vmax.xlane.f32.xlu0 %v785
    %v787 = vpop.xlane.xlu0 %786
    %v788 = vsel %vm175, %v399, -inf
    %789 = vmax.xlane.f32.xlu0 %v788
    %v790 = vpop.xlane.xlu0 %789
    %v791 = vsel %vm175, %v475, -inf
    %792 = vmax.xlane.f32.xlu0 %v791
    %v793 = vpop.xlane.xlu0 %792
    %v794 = vsel %vm175, %v551, -inf
    %795 = vmax.xlane.f32.xlu0 %v794
    %v796 = vpop.xlane.xlu0 %795
    %v797 = vsel %vm175, %v627, -inf
    %798 = vmax.xlane.f32.xlu0 %v797
    %v799 = vpop.xlane.xlu0 %798
    %v800 = vsel %vm175, %v703, -inf
    %801 = vmax.xlane.f32.xlu0 %v800
    %v802 = vpop.xlane.xlu0 %801
    %v803 = vsel %vm175, %v779, -inf
    %804 = vmax.xlane.f32.xlu0 %v803
    %v805 = vpop.xlane.xlu0 %804
    %v806 = vsub.f32 %v247, %v784
    %v807 = vsub.f32 %v323, %v787
    %v808 = vsub.f32 %v399, %v790
    %v809 = vsub.f32 %v475, %v793
    %v810 = vsub.f32 %v551, %v796
    %v811 = vsub.f32 %v627, %v799
    %v812 = vsub.f32 %v703, %v802
    %v813 = vsub.f32 %v779, %v805
    %v814 = vmul.f32 %v806, 1.442695
    %v815 = vpow.pop %v814
    %v816 = vmul.f32 %v807, 1.442695
    %v817 = vpow.pop %v816
    %v818 = vmul.f32 %v808, 1.442695
    %v819 = vpow.pop %v818
    %v820 = vmul.f32 %v809, 1.442695
    %v821 = vpow.pop %v820
    %v822 = vmul.f32 %v810, 1.442695
    %v823 = vpow.pop %v822
    %v824 = vmul.f32 %v811, 1.442695
    %v825 = vpow.pop %v824
    %v826 = vmul.f32 %v812, 1.442695
    %v827 = vpow.pop %v826
    %v828 = vmul.f32 %v813, 1.442695
    %v829 = vpow.pop %v828
    %v830 = vsel %vm175, %v815, 0.0
    %831 = vadd.xlane.f32.xlu0 %v830
    %v832 = vpop.xlane.xlu0 %831
    %v833 = vsel %vm175, %v817, 0.0
    %834 = vadd.xlane.f32.xlu0 %v833
    %v835 = vpop.xlane.xlu0 %834
    %v836 = vsel %vm175, %v819, 0.0
    %837 = vadd.xlane.f32.xlu0 %v836
    %v838 = vpop.xlane.xlu0 %837
    %v839 = vsel %vm175, %v821, 0.0
    %840 = vadd.xlane.f32.xlu0 %v839
    %v841 = vpop.xlane.xlu0 %840
    %v842 = vsel %vm175, %v823, 0.0
    %843 = vadd.xlane.f32.xlu0 %v842
    %v844 = vpop.xlane.xlu0 %843
    %v845 = vsel %vm175, %v825, 0.0
    %846 = vadd.xlane.f32.xlu0 %v845
    %v847 = vpop.xlane.xlu0 %846
    %v848 = vsel %vm175, %v827, 0.0
    %849 = vadd.xlane.f32.xlu0 %v848
    %v850 = vpop.xlane.xlu0 %849
    %v851 = vsel %vm175, %v829, 0.0
    %852 = vadd.xlane.f32.xlu0 %v851
    %v853 = vpop.xlane.xlu0 %852
    %v854 = vrcp.pop %v832
    %v855 = vmul.f32 %v815, %v854
    %v856 = vrcp.pop %v835
    %v857 = vmul.f32 %v817, %v856
    %v858 = vrcp.pop %v838
    %v859 = vmul.f32 %v819, %v858
    %v860 = vrcp.pop %v841
    %v861 = vmul.f32 %v821, %v860
    %v862 = vrcp.pop %v844
    %v863 = vmul.f32 %v823, %v862
    %v864 = vrcp.pop %v847
    %v865 = vmul.f32 %v825, %v864
    %v866 = vrcp.pop %v850
    %v867 = vmul.f32 %v827, %v866
    %v868 = vrcp.pop %v853
    %v869 = vmul.f32 %v829, %v868
    %870 = vrot.lane.b32.xlu0 %v133, 112
    %v871 = vpop.permute.xlu0 %870
    %v874 = vsel %vm175, %v855, 0
    %876 = vmatprep.subr.mxu0 0.0
    %877 = vmatpush1.msra.mxu0 %v871
    %878 = vmatprep.subr.mxu0 0.0
    %879 = vmatpush1.msra.mxu0 0.0
    %880 = vmatprep.subr.mxu0 0.0
    %881 = vmatpush1.msra.mxu0 0.0
    %882 = vmatprep.subr.mxu0 0.0
    %883 = vmatpush1.msra.mxu0 0.0
    %884 = vmatprep.subr.mxu0 0.0
    %885 = vmatpush1.msra.mxu0 0.0
    %886 = vmatprep.subr.mxu0 0.0
    %887 = vmatpush1.msra.mxu0 0.0
    %888 = vmatprep.subr.mxu0 0.0
    %889 = vmatpush1.msra.mxu0 0.0
    %890 = vmatprep.subr.mxu0 0.0
    %891 = vmatpush1.msra.mxu0 0.0
    %892 = vmatprep.subr.mxu0 0.0
    %893 = vmatpush1.msra.mxu0 0.0
    %894 = vmatprep.subr.mxu0 0.0
    %895 = vmatpush1.msra.mxu0 0.0
    %896 = vmatprep.subr.mxu0 0.0
    %897 = vmatpush1.msra.mxu0 0.0
    %898 = vmatprep.subr.mxu0 0.0
    %899 = vmatpush1.msra.mxu0 0.0
    %900 = vmatprep.subr.mxu0 0.0
    %901 = vmatpush1.msra.mxu0 0.0
    %902 = vmatprep.subr.mxu0 0.0
    %903 = vmatpush1.msra.mxu0 0.0
    %904 = vmatprep.subr.mxu0 0.0
    %905 = vmatpush1.msra.mxu0 0.0
    %906 = vmatprep.subr.mxu0 0.0
    %907 = vmatpush1.msra.mxu0 0.0
    %908 = vmatprep.subr.mxu0 0.0
    %909 = vmatpush1.msra.mxu0 0.0
    %910 = vmatprep.subr.mxu0 0.0
    %911 = vmatpush1.msra.mxu0 0.0
    %912 = vmatprep.subr.mxu0 0.0
    %913 = vmatpush1.msra.mxu0 0.0
    %914 = vmatprep.subr.mxu0 0.0
    %915 = vmatpush1.msra.mxu0 0.0
    %916 = vmatprep.subr.mxu0 0.0
    %917 = vmatpush1.msra.mxu0 0.0
    %918 = vmatprep.subr.mxu0 0.0
    %919 = vmatpush1.msra.mxu0 0.0
    %920 = vmatprep.subr.mxu0 0.0
    %921 = vmatpush1.msra.mxu0 0.0
    %922 = vmatprep.subr.mxu0 0.0
    %923 = vmatpush1.msra.mxu0 0.0
    %924 = vmatprep.subr.mxu0 0.0
    %925 = vmatpush1.msra.mxu0 0.0
    %926 = vmatprep.subr.mxu0 0.0
    %927 = vmatpush1.msra.mxu0 0.0
    %928 = vmatprep.subr.mxu0 0.0
    %929 = vmatpush1.msra.mxu0 0.0
    %930 = vmatprep.subr.mxu0 0.0
    %931 = vmatpush1.msra.mxu0 0.0
    %932 = vmatprep.subr.mxu0 0.0
    %933 = vmatpush1.msra.mxu0 0.0
    %934 = vmatprep.subr.mxu0 0.0
    %935 = vmatpush1.msra.mxu0 0.0
    %936 = vmatprep.subr.mxu0 0.0
    %937 = vmatpush1.msra.mxu0 0.0
    %938 = vmatprep.subr.mxu0 0.0
    %939 = vmatpush1.msra.mxu0 0.0
    %940 = vmatprep.mubr.f32.mxu0 0.0
    %941 = vmatmul.mubr.f32.gmra.mrb[0].mxu0 %v874
    %v942 = vpop.f32.mrb[0].mxu0
    %v943 = vadd.f32 0.0, %v942
    %v944 = vpop.f32.mrb[0].mxu0
    %945 = vdwg.mxu0
    %946 = vrot.lane.b32.xlu0 %v138, 112
    %v947 = vpop.permute.xlu0 %946
    %v950 = vsel %vm175, %v857, 0
    %952 = vmatprep.subr.mxu0 0.0
    %953 = vmatpush1.msra.mxu0 %v947
    %954 = vmatprep.subr.mxu0 0.0
    %955 = vmatpush1.msra.mxu0 0.0
    %956 = vmatprep.subr.mxu0 0.0
    %957 = vmatpush1.msra.mxu0 0.0
    %958 = vmatprep.subr.mxu0 0.0
    %959 = vmatpush1.msra.mxu0 0.0
    %960 = vmatprep.subr.mxu0 0.0
    %961 = vmatpush1.msra.mxu0 0.0
    %962 = vmatprep.subr.mxu0 0.0
    %963 = vmatpush1.msra.mxu0 0.0
    %964 = vmatprep.subr.mxu0 0.0
    %965 = vmatpush1.msra.mxu0 0.0
    %966 = vmatprep.subr.mxu0 0.0
    %967 = vmatpush1.msra.mxu0 0.0
    %968 = vmatprep.subr.mxu0 0.0
    %969 = vmatpush1.msra.mxu0 0.0
    %970 = vmatprep.subr.mxu0 0.0
    %971 = vmatpush1.msra.mxu0 0.0
    %972 = vmatprep.subr.mxu0 0.0
    %973 = vmatpush1.msra.mxu0 0.0
    %974 = vmatprep.subr.mxu0 0.0
    %975 = vmatpush1.msra.mxu0 0.0
    %976 = vmatprep.subr.mxu0 0.0
    %977 = vmatpush1.msra.mxu0 0.0
    %978 = vmatprep.subr.mxu0 0.0
    %979 = vmatpush1.msra.mxu0 0.0
    %980 = vmatprep.subr.mxu0 0.0
    %981 = vmatpush1.msra.mxu0 0.0
    %982 = vmatprep.subr.mxu0 0.0
    %983 = vmatpush1.msra.mxu0 0.0
    %984 = vmatprep.subr.mxu0 0.0
    %985 = vmatpush1.msra.mxu0 0.0
    %986 = vmatprep.subr.mxu0 0.0
    %987 = vmatpush1.msra.mxu0 0.0
    %988 = vmatprep.subr.mxu0 0.0
    %989 = vmatpush1.msra.mxu0 0.0
    %990 = vmatprep.subr.mxu0 0.0
    %991 = vmatpush1.msra.mxu0 0.0
    %992 = vmatprep.subr.mxu0 0.0
    %993 = vmatpush1.msra.mxu0 0.0
    %994 = vmatprep.subr.mxu0 0.0
    %995 = vmatpush1.msra.mxu0 0.0
    %996 = vmatprep.subr.mxu0 0.0
    %997 = vmatpush1.msra.mxu0 0.0
    %998 = vmatprep.subr.mxu0 0.0
    %999 = vmatpush1.msra.mxu0 0.0
    %1000 = vmatprep.subr.mxu0 0.0
    %1001 = vmatpush1.msra.mxu0 0.0
    %1002 = vmatprep.subr.mxu0 0.0
    %1003 = vmatpush1.msra.mxu0 0.0
    %1004 = vmatprep.subr.mxu0 0.0
    %1005 = vmatpush1.msra.mxu0 0.0
    %1006 = vmatprep.subr.mxu0 0.0
    %1007 = vmatpush1.msra.mxu0 0.0
    %1008 = vmatprep.subr.mxu0 0.0
    %1009 = vmatpush1.msra.mxu0 0.0
    %1010 = vmatprep.subr.mxu0 0.0
    %1011 = vmatpush1.msra.mxu0 0.0
    %1012 = vmatprep.subr.mxu0 0.0
    %1013 = vmatpush1.msra.mxu0 0.0
    %1014 = vmatprep.subr.mxu0 0.0
    %1015 = vmatpush1.msra.mxu0 0.0
    %1016 = vmatprep.mubr.f32.mxu0 0.0
    %1017 = vmatmul.mubr.f32.gmra.mrb[0].mxu0 %v950
    %v1018 = vpop.f32.mrb[0].mxu0
    %v1019 = vadd.f32 0.0, %v1018
    %v1020 = vpop.f32.mrb[0].mxu0
    %1021 = vdwg.mxu0
    %1022 = vrot.lane.b32.xlu0 %v144, 112
    %v1023 = vpop.permute.xlu0 %1022
    %v1026 = vsel %vm175, %v859, 0
    %1028 = vmatprep.subr.mxu0 0.0
    %1029 = vmatpush1.msra.mxu0 %v1023
    %1030 = vmatprep.subr.mxu0 0.0
    %1031 = vmatpush1.msra.mxu0 0.0
    %1032 = vmatprep.subr.mxu0 0.0
    %1033 = vmatpush1.msra.mxu0 0.0
    %1034 = vmatprep.subr.mxu0 0.0
    %1035 = vmatpush1.msra.mxu0 0.0
    %1036 = vmatprep.subr.mxu0 0.0
    %1037 = vmatpush1.msra.mxu0 0.0
    %1038 = vmatprep.subr.mxu0 0.0
    %1039 = vmatpush1.msra.mxu0 0.0
    %1040 = vmatprep.subr.mxu0 0.0
    %1041 = vmatpush1.msra.mxu0 0.0
    %1042 = vmatprep.subr.mxu0 0.0
    %1043 = vmatpush1.msra.mxu0 0.0
    %1044 = vmatprep.subr.mxu0 0.0
    %1045 = vmatpush1.msra.mxu0 0.0
    %1046 = vmatprep.subr.mxu0 0.0
    %1047 = vmatpush1.msra.mxu0 0.0
    %1048 = vmatprep.subr.mxu0 0.0
    %1049 = vmatpush1.msra.mxu0 0.0
    %1050 = vmatprep.subr.mxu0 0.0
    %1051 = vmatpush1.msra.mxu0 0.0
    %1052 = vmatprep.subr.mxu0 0.0
    %1053 = vmatpush1.msra.mxu0 0.0
    %1054 = vmatprep.subr.mxu0 0.0
    %1055 = vmatpush1.msra.mxu0 0.0
    %1056 = vmatprep.subr.mxu0 0.0
    %1057 = vmatpush1.msra.mxu0 0.0
    %1058 = vmatprep.subr.mxu0 0.0
    %1059 = vmatpush1.msra.mxu0 0.0
    %1060 = vmatprep.subr.mxu0 0.0
    %1061 = vmatpush1.msra.mxu0 0.0
    %1062 = vmatprep.subr.mxu0 0.0
    %1063 = vmatpush1.msra.mxu0 0.0
    %1064 = vmatprep.subr.mxu0 0.0
    %1065 = vmatpush1.msra.mxu0 0.0
    %1066 = vmatprep.subr.mxu0 0.0
    %1067 = vmatpush1.msra.mxu0 0.0
    %1068 = vmatprep.subr.mxu0 0.0
    %1069 = vmatpush1.msra.mxu0 0.0
    %1070 = vmatprep.subr.mxu0 0.0
    %1071 = vmatpush1.msra.mxu0 0.0
    %1072 = vmatprep.subr.mxu0 0.0
    %1073 = vmatpush1.msra.mxu0 0.0
    %1074 = vmatprep.subr.mxu0 0.0
    %1075 = vmatpush1.msra.mxu0 0.0
    %1076 = vmatprep.subr.mxu0 0.0
    %1077 = vmatpush1.msra.mxu0 0.0
    %1078 = vmatprep.subr.mxu0 0.0
    %1079 = vmatpush1.msra.mxu0 0.0
    %1080 = vmatprep.subr.mxu0 0.0
    %1081 = vmatpush1.msra.mxu0 0.0
    %1082 = vmatprep.subr.mxu0 0.0
    %1083 = vmatpush1.msra.mxu0 0.0
    %1084 = vmatprep.subr.mxu0 0.0
    %1085 = vmatpush1.msra.mxu0 0.0
    %1086 = vmatprep.subr.mxu0 0.0
    %1087 = vmatpush1.msra.mxu0 0.0
    %1088 = vmatprep.subr.mxu0 0.0
    %1089 = vmatpush1.msra.mxu0 0.0
    %1090 = vmatprep.subr.mxu0 0.0
    %1091 = vmatpush1.msra.mxu0 0.0
    %1092 = vmatprep.mubr.f32.mxu0 0.0
    %1093 = vmatmul.mubr.f32.gmra.mrb[0].mxu0 %v1026
    %v1094 = vpop.f32.mrb[0].mxu0
    %v1095 = vadd.f32 0.0, %v1094
    %v1096 = vpop.f32.mrb[0].mxu0
    %1097 = vdwg.mxu0
    %1098 = vrot.lane.b32.xlu0 %v146, 112
    %v1099 = vpop.permute.xlu0 %1098
    %v1102 = vsel %vm175, %v861, 0
    %1104 = vmatprep.subr.mxu0 0.0
    %1105 = vmatpush1.msra.mxu0 %v1099
    %1106 = vmatprep.subr.mxu0 0.0
    %1107 = vmatpush1.msra.mxu0 0.0
    %1108 = vmatprep.subr.mxu0 0.0
    %1109 = vmatpush1.msra.mxu0 0.0
    %1110 = vmatprep.subr.mxu0 0.0
    %1111 = vmatpush1.msra.mxu0 0.0
    %1112 = vmatprep.subr.mxu0 0.0
    %1113 = vmatpush1.msra.mxu0 0.0
    %1114 = vmatprep.subr.mxu0 0.0
    %1115 = vmatpush1.msra.mxu0 0.0
    %1116 = vmatprep.subr.mxu0 0.0
    %1117 = vmatpush1.msra.mxu0 0.0
    %1118 = vmatprep.subr.mxu0 0.0
    %1119 = vmatpush1.msra.mxu0 0.0
    %1120 = vmatprep.subr.mxu0 0.0
    %1121 = vmatpush1.msra.mxu0 0.0
    %1122 = vmatprep.subr.mxu0 0.0
    %1123 = vmatpush1.msra.mxu0 0.0
    %1124 = vmatprep.subr.mxu0 0.0
    %1125 = vmatpush1.msra.mxu0 0.0
    %1126 = vmatprep.subr.mxu0 0.0
    %1127 = vmatpush1.msra.mxu0 0.0
    %1128 = vmatprep.subr.mxu0 0.0
    %1129 = vmatpush1.msra.mxu0 0.0
    %1130 = vmatprep.subr.mxu0 0.0
    %1131 = vmatpush1.msra.mxu0 0.0
    %1132 = vmatprep.subr.mxu0 0.0
    %1133 = vmatpush1.msra.mxu0 0.0
    %1134 = vmatprep.subr.mxu0 0.0
    %1135 = vmatpush1.msra.mxu0 0.0
    %1136 = vmatprep.subr.mxu0 0.0
    %1137 = vmatpush1.msra.mxu0 0.0
    %1138 = vmatprep.subr.mxu0 0.0
    %1139 = vmatpush1.msra.mxu0 0.0
    %1140 = vmatprep.subr.mxu0 0.0
    %1141 = vmatpush1.msra.mxu0 0.0
    %1142 = vmatprep.subr.mxu0 0.0
    %1143 = vmatpush1.msra.mxu0 0.0
    %1144 = vmatprep.subr.mxu0 0.0
    %1145 = vmatpush1.msra.mxu0 0.0
    %1146 = vmatprep.subr.mxu0 0.0
    %1147 = vmatpush1.msra.mxu0 0.0
    %1148 = vmatprep.subr.mxu0 0.0
    %1149 = vmatpush1.msra.mxu0 0.0
    %1150 = vmatprep.subr.mxu0 0.0
    %1151 = vmatpush1.msra.mxu0 0.0
    %1152 = vmatprep.subr.mxu0 0.0
    %1153 = vmatpush1.msra.mxu0 0.0
    %1154 = vmatprep.subr.mxu0 0.0
    %1155 = vmatpush1.msra.mxu0 0.0
    %1156 = vmatprep.subr.mxu0 0.0
    %1157 = vmatpush1.msra.mxu0 0.0
    %1158 = vmatprep.subr.mxu0 0.0
    %1159 = vmatpush1.msra.mxu0 0.0
    %1160 = vmatprep.subr.mxu0 0.0
    %1161 = vmatpush1.msra.mxu0 0.0
    %1162 = vmatprep.subr.mxu0 0.0
    %1163 = vmatpush1.msra.mxu0 0.0
    %1164 = vmatprep.subr.mxu0 0.0
    %1165 = vmatpush1.msra.mxu0 0.0
    %1166 = vmatprep.subr.mxu0 0.0
    %1167 = vmatpush1.msra.mxu0 0.0
    %1168 = vmatprep.mubr.f32.mxu0 0.0
    %1169 = vmatmul.mubr.f32.gmra.mrb[0].mxu0 %v1102
    %v1170 = vpop.f32.mrb[0].mxu0
    %v1171 = vadd.f32 0.0, %v1170
    %v1172 = vpop.f32.mrb[0].mxu0
    %1173 = vdwg.mxu0
    %1174 = vrot.lane.b32.xlu0 %v148, 112
    %v1175 = vpop.permute.xlu0 %1174
    %v1178 = vsel %vm175, %v863, 0
    %1180 = vmatprep.subr.mxu0 0.0
    %1181 = vmatpush1.msra.mxu0 %v1175
    %1182 = vmatprep.subr.mxu0 0.0
    %1183 = vmatpush1.msra.mxu0 0.0
    %1184 = vmatprep.subr.mxu0 0.0
    %1185 = vmatpush1.msra.mxu0 0.0
    %1186 = vmatprep.subr.mxu0 0.0
    %1187 = vmatpush1.msra.mxu0 0.0
    %1188 = vmatprep.subr.mxu0 0.0
    %1189 = vmatpush1.msra.mxu0 0.0
    %1190 = vmatprep.subr.mxu0 0.0
    %1191 = vmatpush1.msra.mxu0 0.0
    %1192 = vmatprep.subr.mxu0 0.0
    %1193 = vmatpush1.msra.mxu0 0.0
    %1194 = vmatprep.subr.mxu0 0.0
    %1195 = vmatpush1.msra.mxu0 0.0
    %1196 = vmatprep.subr.mxu0 0.0
    %1197 = vmatpush1.msra.mxu0 0.0
    %1198 = vmatprep.subr.mxu0 0.0
    %1199 = vmatpush1.msra.mxu0 0.0
    %1200 = vmatprep.subr.mxu0 0.0
    %1201 = vmatpush1.msra.mxu0 0.0
    %1202 = vmatprep.subr.mxu0 0.0
    %1203 = vmatpush1.msra.mxu0 0.0
    %1204 = vmatprep.subr.mxu0 0.0
    %1205 = vmatpush1.msra.mxu0 0.0
    %1206 = vmatprep.subr.mxu0 0.0
    %1207 = vmatpush1.msra.mxu0 0.0
    %1208 = vmatprep.subr.mxu0 0.0
    %1209 = vmatpush1.msra.mxu0 0.0
    %1210 = vmatprep.subr.mxu0 0.0
    %1211 = vmatpush1.msra.mxu0 0.0
    %1212 = vmatprep.subr.mxu0 0.0
    %1213 = vmatpush1.msra.mxu0 0.0
    %1214 = vmatprep.subr.mxu0 0.0
    %1215 = vmatpush1.msra.mxu0 0.0
    %1216 = vmatprep.subr.mxu0 0.0
    %1217 = vmatpush1.msra.mxu0 0.0
    %1218 = vmatprep.subr.mxu0 0.0
    %1219 = vmatpush1.msra.mxu0 0.0
    %1220 = vmatprep.subr.mxu0 0.0
    %1221 = vmatpush1.msra.mxu0 0.0
    %1222 = vmatprep.subr.mxu0 0.0
    %1223 = vmatpush1.msra.mxu0 0.0
    %1224 = vmatprep.subr.mxu0 0.0
    %1225 = vmatpush1.msra.mxu0 0.0
    %1226 = vmatprep.subr.mxu0 0.0
    %1227 = vmatpush1.msra.mxu0 0.0
    %1228 = vmatprep.subr.mxu0 0.0
    %1229 = vmatpush1.msra.mxu0 0.0
    %1230 = vmatprep.subr.mxu0 0.0
    %1231 = vmatpush1.msra.mxu0 0.0
    %1232 = vmatprep.subr.mxu0 0.0
    %1233 = vmatpush1.msra.mxu0 0.0
    %1234 = vmatprep.subr.mxu0 0.0
    %1235 = vmatpush1.msra.mxu0 0.0
    %1236 = vmatprep.subr.mxu0 0.0
    %1237 = vmatpush1.msra.mxu0 0.0
    %1238 = vmatprep.subr.mxu0 0.0
    %1239 = vmatpush1.msra.mxu0 0.0
    %1240 = vmatprep.subr.mxu0 0.0
    %1241 = vmatpush1.msra.mxu0 0.0
    %1242 = vmatprep.subr.mxu0 0.0
    %1243 = vmatpush1.msra.mxu0 0.0
    %1244 = vmatprep.mubr.f32.mxu0 0.0
    %1245 = vmatmul.mubr.f32.gmra.mrb[0].mxu0 %v1178
    %v1246 = vpop.f32.mrb[0].mxu0
    %v1247 = vadd.f32 0.0, %v1246
    %v1248 = vpop.f32.mrb[0].mxu0
    %1249 = vdwg.mxu0
    %1250 = vrot.lane.b32.xlu0 %v150, 112
    %v1251 = vpop.permute.xlu0 %1250
    %v1254 = vsel %vm175, %v865, 0
    %1256 = vmatprep.subr.mxu0 0.0
    %1257 = vmatpush1.msra.mxu0 %v1251
    %1258 = vmatprep.subr.mxu0 0.0
    %1259 = vmatpush1.msra.mxu0 0.0
    %1260 = vmatprep.subr.mxu0 0.0
    %1261 = vmatpush1.msra.mxu0 0.0
    %1262 = vmatprep.subr.mxu0 0.0
    %1263 = vmatpush1.msra.mxu0 0.0
    %1264 = vmatprep.subr.mxu0 0.0
    %1265 = vmatpush1.msra.mxu0 0.0
    %1266 = vmatprep.subr.mxu0 0.0
    %1267 = vmatpush1.msra.mxu0 0.0
    %1268 = vmatprep.subr.mxu0 0.0
    %1269 = vmatpush1.msra.mxu0 0.0
    %1270 = vmatprep.subr.mxu0 0.0
    %1271 = vmatpush1.msra.mxu0 0.0
    %1272 = vmatprep.subr.mxu0 0.0
    %1273 = vmatpush1.msra.mxu0 0.0
    %1274 = vmatprep.subr.mxu0 0.0
    %1275 = vmatpush1.msra.mxu0 0.0
    %1276 = vmatprep.subr.mxu0 0.0
    %1277 = vmatpush1.msra.mxu0 0.0
    %1278 = vmatprep.subr.mxu0 0.0
    %1279 = vmatpush1.msra.mxu0 0.0
    %1280 = vmatprep.subr.mxu0 0.0
    %1281 = vmatpush1.msra.mxu0 0.0
    %1282 = vmatprep.subr.mxu0 0.0
    %1283 = vmatpush1.msra.mxu0 0.0
    %1284 = vmatprep.subr.mxu0 0.0
    %1285 = vmatpush1.msra.mxu0 0.0
    %1286 = vmatprep.subr.mxu0 0.0
    %1287 = vmatpush1.msra.mxu0 0.0
    %1288 = vmatprep.subr.mxu0 0.0
    %1289 = vmatpush1.msra.mxu0 0.0
    %1290 = vmatprep.subr.mxu0 0.0
    %1291 = vmatpush1.msra.mxu0 0.0
    %1292 = vmatprep.subr.mxu0 0.0
    %1293 = vmatpush1.msra.mxu0 0.0
    %1294 = vmatprep.subr.mxu0 0.0
    %1295 = vmatpush1.msra.mxu0 0.0
    %1296 = vmatprep.subr.mxu0 0.0
    %1297 = vmatpush1.msra.mxu0 0.0
    %1298 = vmatprep.subr.mxu0 0.0
    %1299 = vmatpush1.msra.mxu0 0.0
    %1300 = vmatprep.subr.mxu0 0.0
    %1301 = vmatpush1.msra.mxu0 0.0
    %1302 = vmatprep.subr.mxu0 0.0
    %1303 = vmatpush1.msra.mxu0 0.0
    %1304 = vmatprep.subr.mxu0 0.0
    %1305 = vmatpush1.msra.mxu0 0.0
    %1306 = vmatprep.subr.mxu0 0.0
    %1307 = vmatpush1.msra.mxu0 0.0
    %1308 = vmatprep.subr.mxu0 0.0
    %1309 = vmatpush1.msra.mxu0 0.0
    %1310 = vmatprep.subr.mxu0 0.0
    %1311 = vmatpush1.msra.mxu0 0.0
    %1312 = vmatprep.subr.mxu0 0.0
    %1313 = vmatpush1.msra.mxu0 0.0
    %1314 = vmatprep.subr.mxu0 0.0
    %1315 = vmatpush1.msra.mxu0 0.0
    %1316 = vmatprep.subr.mxu0 0.0
    %1317 = vmatpush1.msra.mxu0 0.0
    %1318 = vmatprep.subr.mxu0 0.0
    %1319 = vmatpush1.msra.mxu0 0.0
    %1320 = vmatprep.mubr.f32.mxu0 0.0
    %1321 = vmatmul.mubr.f32.gmra.mrb[0].mxu0 %v1254
    %v1322 = vpop.f32.mrb[0].mxu0
    %v1323 = vadd.f32 0.0, %v1322
    %v1324 = vpop.f32.mrb[0].mxu0
    %1325 = vdwg.mxu0
    %1326 = vrot.lane.b32.xlu0 %v152, 112
    %v1327 = vpop.permute.xlu0 %1326
    %v1330 = vsel %vm175, %v867, 0
    %1332 = vmatprep.subr.mxu0 0.0
    %1333 = vmatpush1.msra.mxu0 %v1327
    %1334 = vmatprep.subr.mxu0 0.0
    %1335 = vmatpush1.msra.mxu0 0.0
    %1336 = vmatprep.subr.mxu0 0.0
    %1337 = vmatpush1.msra.mxu0 0.0
    %1338 = vmatprep.subr.mxu0 0.0
    %1339 = vmatpush1.msra.mxu0 0.0
    %1340 = vmatprep.subr.mxu0 0.0
    %1341 = vmatpush1.msra.mxu0 0.0
    %1342 = vmatprep.subr.mxu0 0.0
    %1343 = vmatpush1.msra.mxu0 0.0
    %1344 = vmatprep.subr.mxu0 0.0
    %1345 = vmatpush1.msra.mxu0 0.0
    %1346 = vmatprep.subr.mxu0 0.0
    %1347 = vmatpush1.msra.mxu0 0.0
    %1348 = vmatprep.subr.mxu0 0.0
    %1349 = vmatpush1.msra.mxu0 0.0
    %1350 = vmatprep.subr.mxu0 0.0
    %1351 = vmatpush1.msra.mxu0 0.0
    %1352 = vmatprep.subr.mxu0 0.0
    %1353 = vmatpush1.msra.mxu0 0.0
    %1354 = vmatprep.subr.mxu0 0.0
    %1355 = vmatpush1.msra.mxu0 0.0
    %1356 = vmatprep.subr.mxu0 0.0
    %1357 = vmatpush1.msra.mxu0 0.0
    %1358 = vmatprep.subr.mxu0 0.0
    %1359 = vmatpush1.msra.mxu0 0.0
    %1360 = vmatprep.subr.mxu0 0.0
    %1361 = vmatpush1.msra.mxu0 0.0
    %1362 = vmatprep.subr.mxu0 0.0
    %1363 = vmatpush1.msra.mxu0 0.0
    %1364 = vmatprep.subr.mxu0 0.0
    %1365 = vmatpush1.msra.mxu0 0.0
    %1366 = vmatprep.subr.mxu0 0.0
    %1367 = vmatpush1.msra.mxu0 0.0
    %1368 = vmatprep.subr.mxu0 0.0
    %1369 = vmatpush1.msra.mxu0 0.0
    %1370 = vmatprep.subr.mxu0 0.0
    %1371 = vmatpush1.msra.mxu0 0.0
    %1372 = vmatprep.subr.mxu0 0.0
    %1373 = vmatpush1.msra.mxu0 0.0
    %1374 = vmatprep.subr.mxu0 0.0
    %1375 = vmatpush1.msra.mxu0 0.0
    %1376 = vmatprep.subr.mxu0 0.0
    %1377 = vmatpush1.msra.mxu0 0.0
    %1378 = vmatprep.subr.mxu0 0.0
    %1379 = vmatpush1.msra.mxu0 0.0
    %1380 = vmatprep.subr.mxu0 0.0
    %1381 = vmatpush1.msra.mxu0 0.0
    %1382 = vmatprep.subr.mxu0 0.0
    %1383 = vmatpush1.msra.mxu0 0.0
    %1384 = vmatprep.subr.mxu0 0.0
    %1385 = vmatpush1.msra.mxu0 0.0
    %1386 = vmatprep.subr.mxu0 0.0
    %1387 = vmatpush1.msra.mxu0 0.0
    %1388 = vmatprep.subr.mxu0 0.0
    %1389 = vmatpush1.msra.mxu0 0.0
    %1390 = vmatprep.subr.mxu0 0.0
    %1391 = vmatpush1.msra.mxu0 0.0
    %1392 = vmatprep.subr.mxu0 0.0
    %1393 = vmatpush1.msra.mxu0 0.0
    %1394 = vmatprep.subr.mxu0 0.0
    %1395 = vmatpush1.msra.mxu0 0.0
    %1396 = vmatprep.mubr.f32.mxu0 0.0
    %1397 = vmatmul.mubr.f32.gmra.mrb[0].mxu0 %v1330
    %v1398 = vpop.f32.mrb[0].mxu0
    %v1399 = vadd.f32 0.0, %v1398
    %v1400 = vpop.f32.mrb[0].mxu0
    %1401 = vdwg.mxu0
    %1402 = vrot.lane.b32.xlu0 %v154, 112
    %v1403 = vpop.permute.xlu0 %1402
    %v1406 = vsel %vm175, %v869, 0
    %1408 = vmatprep.subr.mxu0 0.0
    %1409 = vmatpush1.msra.mxu0 %v1403
    %1410 = vmatprep.subr.mxu0 0.0
    %1411 = vmatpush1.msra.mxu0 0.0
    %1412 = vmatprep.subr.mxu0 0.0
    %1413 = vmatpush1.msra.mxu0 0.0
    %1414 = vmatprep.subr.mxu0 0.0
    %1415 = vmatpush1.msra.mxu0 0.0
    %1416 = vmatprep.subr.mxu0 0.0
    %1417 = vmatpush1.msra.mxu0 0.0
    %1418 = vmatprep.subr.mxu0 0.0
    %1419 = vmatpush1.msra.mxu0 0.0
    %1420 = vmatprep.subr.mxu0 0.0
    %1421 = vmatpush1.msra.mxu0 0.0
    %1422 = vmatprep.subr.mxu0 0.0
    %1423 = vmatpush1.msra.mxu0 0.0
    %1424 = vmatprep.subr.mxu0 0.0
    %1425 = vmatpush1.msra.mxu0 0.0
    %1426 = vmatprep.subr.mxu0 0.0
    %1427 = vmatpush1.msra.mxu0 0.0
    %1428 = vmatprep.subr.mxu0 0.0
    %1429 = vmatpush1.msra.mxu0 0.0
    %1430 = vmatprep.subr.mxu0 0.0
    %1431 = vmatpush1.msra.mxu0 0.0
    %1432 = vmatprep.subr.mxu0 0.0
    %1433 = vmatpush1.msra.mxu0 0.0
    %1434 = vmatprep.subr.mxu0 0.0
    %1435 = vmatpush1.msra.mxu0 0.0
    %1436 = vmatprep.subr.mxu0 0.0
    %1437 = vmatpush1.msra.mxu0 0.0
    %1438 = vmatprep.subr.mxu0 0.0
    %1439 = vmatpush1.msra.mxu0 0.0
    %1440 = vmatprep.subr.mxu0 0.0
    %1441 = vmatpush1.msra.mxu0 0.0
    %1442 = vmatprep.subr.mxu0 0.0
    %1443 = vmatpush1.msra.mxu0 0.0
    %1444 = vmatprep.subr.mxu0 0.0
    %1445 = vmatpush1.msra.mxu0 0.0
    %1446 = vmatprep.subr.mxu0 0.0
    %1447 = vmatpush1.msra.mxu0 0.0
    %1448 = vmatprep.subr.mxu0 0.0
    %1449 = vmatpush1.msra.mxu0 0.0
    %1450 = vmatprep.subr.mxu0 0.0
    %1451 = vmatpush1.msra.mxu0 0.0
    %1452 = vmatprep.subr.mxu0 0.0
    %1453 = vmatpush1.msra.mxu0 0.0
    %1454 = vmatprep.subr.mxu0 0.0
    %1455 = vmatpush1.msra.mxu0 0.0
    %1456 = vmatprep.subr.mxu0 0.0
    %1457 = vmatpush1.msra.mxu0 0.0
    %1458 = vmatprep.subr.mxu0 0.0
    %1459 = vmatpush1.msra.mxu0 0.0
    %1460 = vmatprep.subr.mxu0 0.0
    %1461 = vmatpush1.msra.mxu0 0.0
    %1462 = vmatprep.subr.mxu0 0.0
    %1463 = vmatpush1.msra.mxu0 0.0
    %1464 = vmatprep.subr.mxu0 0.0
    %1465 = vmatpush1.msra.mxu0 0.0
    %1466 = vmatprep.subr.mxu0 0.0
    %1467 = vmatpush1.msra.mxu0 0.0
    %1468 = vmatprep.subr.mxu0 0.0
    %1469 = vmatpush1.msra.mxu0 0.0
    %1470 = vmatprep.subr.mxu0 0.0
    %1471 = vmatpush1.msra.mxu0 0.0
    %1472 = vmatprep.mubr.f32.mxu0 0.0
    %1473 = vmatmul.mubr.f32.gmra.mrb[0].mxu0 %v1406
    %v1474 = vpop.f32.mrb[0].mxu0
    %v1475 = vadd.f32 0.0, %v1474
    %v1476 = vpop.f32.mrb[0].mxu0
    %1477 = vdwg.mxu0
    %1480 = vrot.lane.b32.xlu0 %v1095, 8
    %v1481 = vpop.permute.xlu0 %1480
    %1482 = vrot.lane.b32.xlu0 %v1171, 8
    %v1483 = vpop.permute.xlu0 %1482
    %1488 = vrot.lane.b32.xlu0 %v1247, 16
    %v1489 = vpop.permute.xlu0 %1488
    %1490 = vrot.lane.b32.xlu0 %v1323, 16
    %v1491 = vpop.permute.xlu0 %1490
    %1496 = vrot.lane.b32.xlu0 %v1399, 24
    %v1497 = vpop.permute.xlu0 %1496
    %1498 = vrot.lane.b32.xlu0 %v1475, 24
    %v1499 = vpop.permute.xlu0 %1498
    %v1502 = vsel %vm175, %v943, %v1481
    %v1503 = vsel %vm175, %v1019, %v1483
    %vm1504 = vcmask 130048
    %v1505 = vsel %vm1504, %v1502, %v1489
    %v1506 = vsel %vm1504, %v1503, %v1491
    %vm1507 = vcmask 195584
    %v1508 = vsel %vm1507, %v1505, %v1497
    %v1509 = vsel %vm1507, %v1506, %v1499
    %1510 = vst.msk [vmem:[#allocation7] sm:$0xff] %vm59, %v1508
    %1511 = vst.msk [vmem:[#allocation7 + $0x8] sm:$0xff] %vm59, %v1509
    // Predicated region
    $region26: #{tpu_custom_call.1} parent=1 // pred_check
      _
    $region27: #{tpu_custom_call.1} parent=1 // pred_check_branch
      %1513 = sbr.rel (0) target = $region29
    $region28: #{tpu_custom_call.1} parent=1 // pred_region
      %s1515 = ssub.s32 256, 256
      %1516 = vsyncadd [#allocation4], %s1515
      %s1517 = sshll.u32 [#allocation7], 4
      %s1518 = int_to_ptr.vmem [resolvable:$true] %s1517
      %1523 = dma.vmem_to_hbm [thread:$0]  %s1518, 256, %s4, [#allocation4], 128, 128, 8
    $region29: #{tpu_custom_call.1} parent=1 // pred_fallthru
      _
    // Predicated region
    $region30: #{tpu_custom_call.1} parent=1 // pred_check
      _
    $region31: #{tpu_custom_call.1} parent=1 // pred_check_branch
      %1525 = sbr.rel (0) target = $region33
    $region32: #{tpu_custom_call.1} parent=1 // pred_region
      %1526 = dma.done [#allocation4], 256
    $region33: #{tpu_custom_call.1} parent=1 // pred_fallthru
      _
    %1527 = vsyncpa [#allocation3], 1
    %1528 = vsyncpa [#allocation6], 1
    %1529 = vsyncpa [#allocation4], 1

</llo_original>
